<compile_context>
chip_gen: v6e
topology: v6e:2x2x1
jax: 0.10.0
libtpu: 0.0.40
codegen_flags: <defaults>
</compile_context>

<pallas_src>
import functools

import jax
import jax.numpy as jnp
from jax.experimental import pallas as pl
from jax.experimental.pallas import tpu as pltpu

_BN_EPS = 1e-5


def _aspp_shifts(dils):
    """Ordered list of the distinct (dy, dx) spatial shifts used by the ASPP branches."""
    shifts = [(0, 0)]
    for d in dils:
        for sy in (-1, 0, 1):
            for sx in (-1, 0, 1):
                if (sy, sx) != (0, 0):
                    shifts.append((sy * d, sx * d))
    return shifts


# ---------------------------------------------------------------------------
# Fused kernel: conv3x3+BN+ReLU -> ASPP(1x1, 3x 3x3 dilated, pool) -> 1x1 proj
# All activations are channels-first flat tiles (C, H*W)  (lane-dense).
# ---------------------------------------------------------------------------
def _bottleneck_kernel(x_ref, mask_ref, wc_ref, csc_ref, csh_ref,
                       wb_ref, bsc_ref, bsh_ref, wp_ref, psc_ref, psh_ref,
                       o_ref, xp_ref, op_ref, stk_ref,
                       *, H, W, dils, dx_index, pad_x, pad_o):
    f32, bf16 = jnp.float32, jnp.bfloat16
    HW = H * W
    Cin = x_ref.shape[1]
    C = o_ref.shape[1]
    shifts = _aspp_shifts(dils)
    n_shift = len(shifts)

    def col_mask(dx):
        # (1, HW) f32 column-validity mask for shift dx (kills row-wrap of the flat shift).
        i = dx_index[dx]
        return mask_ref[i:i + 1, :]

    def tap(pad_ref, pad, dy, dx):
        # Spatially shifted, zero-padded view of the image staged in pad_ref, as a flat
        # (Ch, HW) f32 tile: rows out of range land in the zero pad of the flat buffer,
        # column wrap-around is masked per dx.
        start = pad + dy * W + dx
        t = pad_ref[:, start:start + HW]
        if dx != 0:
            t = t * col_mask(dx)
        return t

    # ------------- stage 1: conv3x3 (pad=1) + folded BN + ReLU -------------
    xp_ref[...] = jnp.zeros_like(xp_ref)
    xp_ref[:, pad_x:pad_x + HW] = x_ref[0].astype(f32)       # stage padded flat input

    out = jnp.zeros((C, HW), f32)
    for ky in range(3):
        for kx in range(3):
            t = tap(xp_ref, pad_x, ky - 1, kx - 1).astype(bf16)          # (Cin, HW)
            out = out + jnp.dot(wc_ref[ky * 3 + kx], t,
                                preferred_element_type=f32)              # (C, HW)
    out = jnp.maximum(out * csc_ref[...] + csh_ref[...], 0.0)
    # quantize once (matches the bf16 HBM round trip the un-fused version had)
    out = out.astype(bf16).astype(f32)

    # ---- stage 2: all ASPP branches (1x1, 3 dilated 3x3, global pool) as ONE matmul ----
    op_ref[...] = jnp.zeros_like(op_ref)
    op_ref[:, pad_o:pad_o + HW] = out                        # stage padded flat `out`

    for i, (dy, dx) in enumerate(shifts):                    # 25 shift-expanded K blocks
        stk_ref[i * C:(i + 1) * C, :] = tap(op_ref, pad_o, dy, dx)
    # last K block: global-average-pool broadcast (bilinear upsample of 1x1 == constant)
    pooled = jnp.mean(out, axis=1, keepdims=True)            # (C, 1)
    stk_ref[n_shift * C:(n_shift + 1) * C, :] = jnp.broadcast_to(pooled, (C, HW))

    br = jnp.dot(wb_ref[...], stk_ref[...].astype(bf16),
                 preferred_element_type=f32)                 # (5C, HW)
    br = jnp.maximum(br * bsc_ref[...] + bsh_ref[...], 0.0)  # per-branch folded BN + ReLU

    # -------- stage 3: concat-free 1x1 projection + folded BN + ReLU --------
    # TODO(synk): Dropout(0.5) after the ASPP projection is identity in eval mode; skipped.
    y = jnp.dot(wp_ref[...], br.astype(bf16), preferred_element_type=f32)   # (C, HW)
    y = jnp.maximum(y * psc_ref[...] + psh_ref[...], 0.0)
    o_ref[...] = y.reshape(1, C, HW).astype(o_ref.dtype)


# ---------------------------------------------------------------------------
# Wrapper: NCHW in / NCHW out, zero transposes (flat reshapes only)
# ---------------------------------------------------------------------------
def bottleneck_forward(x_nchw, params, *, dils=(6, 12, 18)):
    N, Cin, H, W = x_nchw.shape
    C = params["conv"][0].shape[-1]
    HW = H * W
    f32, bf16 = jnp.float32, jnp.bfloat16

    # NCHW is already channels-first; flattening H,W is a free (contiguous) reshape.
    x_flat = x_nchw.reshape(N, Cin, HW).astype(bf16)

    # ---- stage-1 weights: (9, Cout, Cin), tap-major, pre-transposed for W^T @ X ----
    wconv, csc, csh = params["conv"]                          # (3,3,Cin,C), (C,), (C,)
    wc = jnp.transpose(wconv, (0, 1, 3, 2)).reshape(9, C, Cin).astype(bf16)
    csc = csc.reshape(C, 1)
    csh = csh.reshape(C, 1)

    # ---- ASPP: pack every branch's tap weights into one (5C, 26C) matrix ----
    shifts = _aspp_shifts(dils)
    n_blk = len(shifts) + 1                                   # +1 pooled-broadcast block
    blk = {s: i for i, s in enumerate(shifts)}

    wb = jnp.zeros((5 * C, n_blk * C), f32)

    def put(mat, row_b, col_b, w_io):                         # w_io: (Cin=C, Cout=C)
        return mat.at[row_b * C:(row_b + 1) * C,
                      col_b * C:(col_b + 1) * C].set(w_io.T)

    wb = put(wb, 0, blk[(0, 0)], params["aspp_1x1"][0].reshape(C, C))
    for bi, (key, d) in enumerate(zip(("aspp_r6", "aspp_r12", "aspp_r18"), dils), start=1):
        w3 = params[key][0]                                   # (3,3,C,C)
        for ky in range(3):
            for kx in range(3):
                wb = put(wb, bi, blk[((ky - 1) * d, (kx - 1) * d)], w3[ky, kx])
    wb = put(wb, 4, n_blk - 1, params["aspp_pool"][0].reshape(C, C))
    wb = wb.astype(bf16)

    branch_keys = ("aspp_1x1", "aspp_r6", "aspp_r12", "aspp_r18", "aspp_pool")
    bsc = jnp.concatenate([params[k][1] for k in branch_keys]).reshape(5 * C, 1)
    bsh = jnp.concatenate([params[k][2] for k in branch_keys]).reshape(5 * C, 1)

    wp = params["project"][0].reshape(5 * C, C).T.astype(bf16)   # (C, 5C)
    psc = params["project"][1].reshape(C, 1)
    psh = params["project"][2].reshape(C, 1)

    # ---- per-dx column-validity masks (row OOB is handled by the flat zero padding) ----
    dx_vals = sorted({s * d for d in (1,) + tuple(dils) for s in (-1, 1)})
    dx_index = {dx: i for i, dx in enumerate(dx_vals)}
    col = jnp.arange(HW, dtype=jnp.int32) % W
    masks = jnp.stack([((col + dx >= 0) & (col + dx < W)).astype(f32) for dx in dx_vals])

    # ---- flat zero-pad sizes (rounded to a lane tile so the staging stores are aligned) ----
    pad_x = pl.cdiv(W + 1, 128) * 128
    pad_o = pl.cdiv(max(dils) * (W + 1), 128) * 128

    kernel = functools.partial(_bottleneck_kernel, H=H, W=W, dils=tuple(dils),
                               dx_index=dx_index, pad_x=pad_x, pad_o=pad_o)

    y = pl.pallas_call(
        kernel,
        out_shape=jax.ShapeDtypeStruct((N, C, HW), f32),
        grid=(N,),
        in_specs=[
            pl.BlockSpec((1, Cin, HW), lambda n: (n, 0, 0)),
            pl.BlockSpec(masks.shape, lambda n: (0, 0)),
            pl.BlockSpec(wc.shape, lambda n: (0, 0, 0)),
            pl.BlockSpec(csc.shape, lambda n: (0, 0)),
            pl.BlockSpec(csh.shape, lambda n: (0, 0)),
            pl.BlockSpec(wb.shape, lambda n: (0, 0)),
            pl.BlockSpec(bsc.shape, lambda n: (0, 0)),
            pl.BlockSpec(bsh.shape, lambda n: (0, 0)),
            pl.BlockSpec(wp.shape, lambda n: (0, 0)),
            pl.BlockSpec(psc.shape, lambda n: (0, 0)),
            pl.BlockSpec(psh.shape, lambda n: (0, 0)),
        ],
        out_specs=pl.BlockSpec((1, C, HW), lambda n: (n, 0, 0)),
        scratch_shapes=[
            pltpu.VMEM((Cin, HW + 2 * pad_x), f32),           # zero-padded flat x
            pltpu.VMEM((C, HW + 2 * pad_o), f32),             # zero-padded flat `out`
            pltpu.VMEM((n_blk * C, HW), f32),                 # stacked ASPP matmul RHS
        ],
        compiler_params=pltpu.CompilerParams(
            dimension_semantics=("parallel",),
            vmem_limit_bytes=32 * 1024 * 1024),
    )(x_flat, masks, wc, csc, csh, wb, bsc, bsh, wp, psc, psh)

    return y.reshape(N, C, H, W)                              # free reshape -> NCHW


# ---------------------------------------------------------------------------
# Parameter construction (deterministic, BN folded to scale/shift)
# ---------------------------------------------------------------------------
def make_conv_bn_params(key, cin, cout, k, conv_bias):
    k1, k2, k3, k4, k5, k6 = jax.random.split(key, 6)
    w = 0.1 * jax.random.normal(k1, (k, k, cin, cout), jnp.float32)   # HWIO
    b = (0.1 * jax.random.normal(k2, (cout,), jnp.float32)
         if conv_bias else jnp.zeros((cout,), jnp.float32))
    gamma = 1.0 + 0.1 * jax.random.normal(k3, (cout,), jnp.float32)
    beta = 0.1 * jax.random.normal(k4, (cout,), jnp.float32)
    mean = 0.1 * jax.random.normal(k5, (cout,), jnp.float32)
    var = 0.5 + 0.1 * jnp.abs(jax.random.normal(k6, (cout,), jnp.float32))
    scale = gamma / jnp.sqrt(var + _BN_EPS)
    shift = scale * (b - mean) + beta
    return (w, scale, shift)


def make_bottleneck_params(key, in_ch, out_ch):
    keys = jax.random.split(key, 7)
    return {
        # nn.Conv2d(in_ch, out_ch, 3, padding=1, bias=True) + BN + ReLU
        "conv":      make_conv_bn_params(keys[0], in_ch, out_ch, 3, conv_bias=True),
        # ASPP branches (torchvision-style: conv(bias=False) + BN + ReLU)
        "aspp_1x1":  make_conv_bn_params(keys[1], out_ch, out_ch, 1, conv_bias=False),
        "aspp_r6":   make_conv_bn_params(keys[2], out_ch, out_ch, 3, conv_bias=False),
        "aspp_r12":  make_conv_bn_params(keys[3], out_ch, out_ch, 3, conv_bias=False),
        "aspp_r18":  make_conv_bn_params(keys[4], out_ch, out_ch, 3, conv_bias=False),
        "aspp_pool": make_conv_bn_params(keys[5], out_ch, out_ch, 1, conv_bias=False),
        # projection: 1x1 conv(5*out_ch -> out_ch, bias=False) + BN + ReLU (+Dropout)
        "project":   make_conv_bn_params(keys[6], 5 * out_ch, out_ch, 1, conv_bias=False),
    }


# ---------------------------------------------------------------------------
# Pure-JAX reference (mirrors the bf16-MXU / f32-accumulate math of the kernel)
# ---------------------------------------------------------------------------
def _ref_conv_bn_relu(x, w, scale, shift, dil, pad):
    y = jax.lax.conv_general_dilated(
        x.astype(jnp.bfloat16), w.astype(jnp.bfloat16),
        window_strides=(1, 1), padding=[(pad, pad), (pad, pad)],
        rhs_dilation=(dil, dil), dimension_numbers=("NHWC", "HWIO", "NHWC"),
        preferred_element_type=jnp.float32)
    return jnp.maximum(y * scale + shift, 0.0)


def _ref_forward(x_nchw, params):
    x = jnp.transpose(x_nchw, (0, 2, 3, 1)).astype(jnp.float32)
    out = _ref_conv_bn_relu(x, *params["conv"], 1, 1).astype(jnp.bfloat16)
    b0 = _ref_conv_bn_relu(out, *params["aspp_1x1"], 1, 0)
    b1 = _ref_conv_bn_relu(out, *params["aspp_r6"], 6, 6)
    b2 = _ref_conv_bn_relu(out, *params["aspp_r12"], 12, 12)
    b3 = _ref_conv_bn_relu(out, *params["aspp_r18"], 18, 18)
    pooled = jnp.mean(out.astype(jnp.float32), axis=(1, 2), keepdims=True)
    b4 = _ref_conv_bn_relu(pooled, *params["aspp_pool"], 1, 0)
    N, H, W, _ = out.shape
    b4 = jnp.broadcast_to(b4, (N, H, W, b4.shape[-1]))
    cat = jnp.concatenate([b0, b1, b2, b3, b4], axis=-1)
    proj = _ref_conv_bn_relu(cat, *params["project"], 1, 0)
    return jnp.transpose(proj, (0, 3, 1, 2))


# ---------------------------------------------------------------------------
if __name__ == "__main__":
    key = jax.random.PRNGKey(0)
    k_x, k_p = jax.random.split(key)

    N, IN_CH, OUT_CH, H, W = 2, 4, 8, 16, 16
    x = jax.random.normal(k_x, (N, IN_CH, H, W), jnp.float32)        # NCHW like PyTorch
    params = make_bottleneck_params(k_p, IN_CH, OUT_CH)

    out = jax.block_until_ready(jax.jit(bottleneck_forward)(x, params))
    ref = jax.block_until_ready(jax.jit(_ref_forward)(x, params))

    assert out.shape == (N, OUT_CH, H, W), out.shape
    # bf16 MXU operands (matching math in kernel & reference) -> modest tolerance.
    assert jnp.allclose(out, ref, atol=2e-2, rtol=2e-2), float(jnp.max(jnp.abs(out - ref)))

    print("KERNEL_OK")
</pallas_src>

<mosaic_0001>
module attributes {stable_mosaic.version = 11 : i64} {
  func.func @_bottleneck_kernel(%arg0: i32, %arg1: memref<1x4x256xbf16, #tpu.memory_space<vmem>>, %arg2: memref<8x256xf32, #tpu.memory_space<vmem>>, %arg3: memref<9x8x4xbf16, #tpu.memory_space<vmem>>, %arg4: memref<8x1xf32, #tpu.memory_space<vmem>>, %arg5: memref<8x1xf32, #tpu.memory_space<vmem>>, %arg6: memref<40x208xbf16, #tpu.memory_space<vmem>>, %arg7: memref<40x1xf32, #tpu.memory_space<vmem>>, %arg8: memref<40x1xf32, #tpu.memory_space<vmem>>, %arg9: memref<8x40xbf16, #tpu.memory_space<vmem>>, %arg10: memref<8x1xf32, #tpu.memory_space<vmem>>, %arg11: memref<8x1xf32, #tpu.memory_space<vmem>>, %arg12: memref<1x8x256xf32, #tpu.memory_space<vmem>>, %arg13: memref<4x512xf32, #tpu.memory_space<vmem>>, %arg14: memref<8x1024xf32, #tpu.memory_space<vmem>>, %arg15: memref<208x256xf32, #tpu.memory_space<vmem>>) attributes {dimension_semantics = [#tpu.dimension_semantics<parallel>], iteration_bounds = array<i64: 2>, scalar_prefetch = 0 : i64, scratch_operands = 3 : i64, tpu.core_type = #tpu.core_type<tc>, window_params = [{transform_indices = @transform_0, window_bounds = array<i64: 1, 4, 256>}, {pipeline_mode = #tpu.pipeline_mode<synchronous>, transform_indices = @transform_1, window_bounds = array<i64: 8, 256>}, {pipeline_mode = #tpu.pipeline_mode<synchronous>, transform_indices = @transform_2, window_bounds = array<i64: 9, 8, 4>}, {pipeline_mode = #tpu.pipeline_mode<synchronous>, transform_indices = @transform_3, window_bounds = array<i64: 8, 1>}, {pipeline_mode = #tpu.pipeline_mode<synchronous>, transform_indices = @transform_4, window_bounds = array<i64: 8, 1>}, {pipeline_mode = #tpu.pipeline_mode<synchronous>, transform_indices = @transform_5, window_bounds = array<i64: 40, 208>}, {pipeline_mode = #tpu.pipeline_mode<synchronous>, transform_indices = @transform_6, window_bounds = array<i64: 40, 1>}, {pipeline_mode = #tpu.pipeline_mode<synchronous>, transform_indices = @transform_7, window_bounds = array<i64: 40, 1>}, {pipeline_mode = #tpu.pipeline_mode<synchronous>, transform_indices = @transform_8, window_bounds = array<i64: 8, 40>}, {pipeline_mode = #tpu.pipeline_mode<synchronous>, transform_indices = @transform_9, window_bounds = array<i64: 8, 1>}, {pipeline_mode = #tpu.pipeline_mode<synchronous>, transform_indices = @transform_10, window_bounds = array<i64: 8, 1>}, {transform_indices = @transform_11, window_bounds = array<i64: 1, 8, 256>}]} {
    %cst = arith.constant 0.000000e+00 : f32
    %0 = vector.broadcast %cst : f32 to vector<4x512xf32>
    %c0 = arith.constant 0 : index
    %c0_0 = arith.constant 0 : index
    %1 = vector.load %arg13[%c0, %c0_0] : memref<4x512xf32, #tpu.memory_space<vmem>>, vector<4x512xf32>
    tpu.vector_store %arg13[%c0, %c0_0], %0 {strides = array<i32>} : memref<4x512xf32, #tpu.memory_space<vmem>>, vector<4x512xf32>,
    %c0_1 = arith.constant 0 : index
    %c0_2 = arith.constant 0 : index
    %c0_3 = arith.constant 0 : index
    %2 = vector.load %arg1[%c0_1, %c0_2, %c0_3] : memref<1x4x256xbf16, #tpu.memory_space<vmem>>, vector<1x4x256xbf16>
    %3 = vector.shape_cast %2 : vector<1x4x256xbf16> to vector<4x256xbf16>
    %4 = arith.extf %3 : vector<4x256xbf16> to vector<4x256xf32>
    %c0_4 = arith.constant 0 : index
    %c128 = arith.constant 128 : index
    %5 = vector.load %arg13[%c0_4, %c128] : memref<4x512xf32, #tpu.memory_space<vmem>>, vector<4x256xf32>
    tpu.vector_store %arg13[%c0_4, %c128], %4 {strides = array<i32>} : memref<4x512xf32, #tpu.memory_space<vmem>>, vector<4x256xf32>,
    %cst_5 = arith.constant 0.000000e+00 : f32
    %6 = vector.broadcast %cst_5 : f32 to vector<8x256xf32>
    %c0_6 = arith.constant 0 : index
    %c111 = arith.constant 111 : index
    %7 = vector.load %arg13[%c0_6, %c111] : memref<4x512xf32, #tpu.memory_space<vmem>>, vector<4x256xf32>
    %c3 = arith.constant 3 : index
    %c0_7 = arith.constant 0 : index
    %8 = vector.load %arg2[%c3, %c0_7] : memref<8x256xf32, #tpu.memory_space<vmem>>, vector<1x256xf32>
    %9 = vector.broadcast %8 : vector<1x256xf32> to vector<4x256xf32>
    %10 = arith.mulf %7, %9 : vector<4x256xf32>
    %11 = arith.truncf %10 : vector<4x256xf32> to vector<4x256xbf16>
    %c0_8 = arith.constant 0 : index
    %c0_9 = arith.constant 0 : index
    %c0_10 = arith.constant 0 : index
    %12 = vector.load %arg3[%c0_8, %c0_9, %c0_10] : memref<9x8x4xbf16, #tpu.memory_space<vmem>>, vector<1x8x4xbf16>
    %13 = vector.shape_cast %12 : vector<1x8x4xbf16> to vector<8x4xbf16>
    %cst_11 = arith.constant dense<0.000000e+00> : vector<8x256xf32>
    %14 = tpu.matmul %13, %11, %cst_11 {dimension_numbers = #tpu.dot_dimension_numbers<[1], [0], [0], [1], [0, 0, 1, 1], [], []>} : vector<8x4xbf16>, vector<4x256xbf16>, vector<8x256xf32> -> vector<8x256xf32>
    %15 = arith.addf %6, %14 : vector<8x256xf32>
    %c0_12 = arith.constant 0 : index
    %c112 = arith.constant 112 : index
    %16 = vector.load %arg13[%c0_12, %c112] : memref<4x512xf32, #tpu.memory_space<vmem>>, vector<4x256xf32>
    %17 = arith.truncf %16 : vector<4x256xf32> to vector<4x256xbf16>
    %c1 = arith.constant 1 : index
    %c0_13 = arith.constant 0 : index
    %c0_14 = arith.constant 0 : index
    %18 = vector.load %arg3[%c1, %c0_13, %c0_14] : memref<9x8x4xbf16, #tpu.memory_space<vmem>>, vector<1x8x4xbf16>
    %19 = vector.shape_cast %18 : vector<1x8x4xbf16> to vector<8x4xbf16>
    %cst_15 = arith.constant dense<0.000000e+00> : vector<8x256xf32>
    %20 = tpu.matmul %19, %17, %cst_15 {dimension_numbers = #tpu.dot_dimension_numbers<[1], [0], [0], [1], [0, 0, 1, 1], [], []>} : vector<8x4xbf16>, vector<4x256xbf16>, vector<8x256xf32> -> vector<8x256xf32>
    %21 = arith.addf %15, %20 : vector<8x256xf32>
    %c0_16 = arith.constant 0 : index
    %c113 = arith.constant 113 : index
    %22 = vector.load %arg13[%c0_16, %c113] : memref<4x512xf32, #tpu.memory_space<vmem>>, vector<4x256xf32>
    %c4 = arith.constant 4 : index
    %c0_17 = arith.constant 0 : index
    %23 = vector.load %arg2[%c4, %c0_17] : memref<8x256xf32, #tpu.memory_space<vmem>>, vector<1x256xf32>
    %24 = vector.broadcast %23 : vector<1x256xf32> to vector<4x256xf32>
    %25 = arith.mulf %22, %24 : vector<4x256xf32>
    %26 = arith.truncf %25 : vector<4x256xf32> to vector<4x256xbf16>
    %c2 = arith.constant 2 : index
    %c0_18 = arith.constant 0 : index
    %c0_19 = arith.constant 0 : index
    %27 = vector.load %arg3[%c2, %c0_18, %c0_19] : memref<9x8x4xbf16, #tpu.memory_space<vmem>>, vector<1x8x4xbf16>
    %28 = vector.shape_cast %27 : vector<1x8x4xbf16> to vector<8x4xbf16>
    %cst_20 = arith.constant dense<0.000000e+00> : vector<8x256xf32>
    %29 = tpu.matmul %28, %26, %cst_20 {dimension_numbers = #tpu.dot_dimension_numbers<[1], [0], [0], [1], [0, 0, 1, 1], [], []>} : vector<8x4xbf16>, vector<4x256xbf16>, vector<8x256xf32> -> vector<8x256xf32>
    %30 = arith.addf %21, %29 : vector<8x256xf32>
    %c0_21 = arith.constant 0 : index
    %c127 = arith.constant 127 : index
    %31 = vector.load %arg13[%c0_21, %c127] : memref<4x512xf32, #tpu.memory_space<vmem>>, vector<4x256xf32>
    %c3_22 = arith.constant 3 : index
    %c0_23 = arith.constant 0 : index
    %32 = vector.load %arg2[%c3_22, %c0_23] : memref<8x256xf32, #tpu.memory_space<vmem>>, vector<1x256xf32>
    %33 = vector.broadcast %32 : vector<1x256xf32> to vector<4x256xf32>
    %34 = arith.mulf %31, %33 : vector<4x256xf32>
    %35 = arith.truncf %34 : vector<4x256xf32> to vector<4x256xbf16>
    %c3_24 = arith.constant 3 : index
    %c0_25 = arith.constant 0 : index
    %c0_26 = arith.constant 0 : index
    %36 = vector.load %arg3[%c3_24, %c0_25, %c0_26] : memref<9x8x4xbf16, #tpu.memory_space<vmem>>, vector<1x8x4xbf16>
    %37 = vector.shape_cast %36 : vector<1x8x4xbf16> to vector<8x4xbf16>
    %cst_27 = arith.constant dense<0.000000e+00> : vector<8x256xf32>
    %38 = tpu.matmul %37, %35, %cst_27 {dimension_numbers = #tpu.dot_dimension_numbers<[1], [0], [0], [1], [0, 0, 1, 1], [], []>} : vector<8x4xbf16>, vector<4x256xbf16>, vector<8x256xf32> -> vector<8x256xf32>
    %39 = arith.addf %30, %38 : vector<8x256xf32>
    %c0_28 = arith.constant 0 : index
    %c128_29 = arith.constant 128 : index
    %40 = vector.load %arg13[%c0_28, %c128_29] : memref<4x512xf32, #tpu.memory_space<vmem>>, vector<4x256xf32>
    %41 = arith.truncf %40 : vector<4x256xf32> to vector<4x256xbf16>
    %c4_30 = arith.constant 4 : index
    %c0_31 = arith.constant 0 : index
    %c0_32 = arith.constant 0 : index
    %42 = vector.load %arg3[%c4_30, %c0_31, %c0_32] : memref<9x8x4xbf16, #tpu.memory_space<vmem>>, vector<1x8x4xbf16>
    %43 = vector.shape_cast %42 : vector<1x8x4xbf16> to vector<8x4xbf16>
    %cst_33 = arith.constant dense<0.000000e+00> : vector<8x256xf32>
    %44 = tpu.matmul %43, %41, %cst_33 {dimension_numbers = #tpu.dot_dimension_numbers<[1], [0], [0], [1], [0, 0, 1, 1], [], []>} : vector<8x4xbf16>, vector<4x256xbf16>, vector<8x256xf32> -> vector<8x256xf32>
    %45 = arith.addf %39, %44 : vector<8x256xf32>
    %c0_34 = arith.constant 0 : index
    %c129 = arith.constant 129 : index
    %46 = vector.load %arg13[%c0_34, %c129] : memref<4x512xf32, #tpu.memory_space<vmem>>, vector<4x256xf32>
    %c4_35 = arith.constant 4 : index
    %c0_36 = arith.constant 0 : index
    %47 = vector.load %arg2[%c4_35, %c0_36] : memref<8x256xf32, #tpu.memory_space<vmem>>, vector<1x256xf32>
    %48 = vector.broadcast %47 : vector<1x256xf32> to vector<4x256xf32>
    %49 = arith.mulf %46, %48 : vector<4x256xf32>
    %50 = arith.truncf %49 : vector<4x256xf32> to vector<4x256xbf16>
    %c5 = arith.constant 5 : index
    %c0_37 = arith.constant 0 : index
    %c0_38 = arith.constant 0 : index
    %51 = vector.load %arg3[%c5, %c0_37, %c0_38] : memref<9x8x4xbf16, #tpu.memory_space<vmem>>, vector<1x8x4xbf16>
    %52 = vector.shape_cast %51 : vector<1x8x4xbf16> to vector<8x4xbf16>
    %cst_39 = arith.constant dense<0.000000e+00> : vector<8x256xf32>
    %53 = tpu.matmul %52, %50, %cst_39 {dimension_numbers = #tpu.dot_dimension_numbers<[1], [0], [0], [1], [0, 0, 1, 1], [], []>} : vector<8x4xbf16>, vector<4x256xbf16>, vector<8x256xf32> -> vector<8x256xf32>
    %54 = arith.addf %45, %53 : vector<8x256xf32>
    %c0_40 = arith.constant 0 : index
    %c143 = arith.constant 143 : index
    %55 = vector.load %arg13[%c0_40, %c143] : memref<4x512xf32, #tpu.memory_space<vmem>>, vector<4x256xf32>
    %c3_41 = arith.constant 3 : index
    %c0_42 = arith.constant 0 : index
    %56 = vector.load %arg2[%c3_41, %c0_42] : memref<8x256xf32, #tpu.memory_space<vmem>>, vector<1x256xf32>
    %57 = vector.broadcast %56 : vector<1x256xf32> to vector<4x256xf32>
    %58 = arith.mulf %55, %57 : vector<4x256xf32>
    %59 = arith.truncf %58 : vector<4x256xf32> to vector<4x256xbf16>
    %c6 = arith.constant 6 : index
    %c0_43 = arith.constant 0 : index
    %c0_44 = arith.constant 0 : index
    %60 = vector.load %arg3[%c6, %c0_43, %c0_44] : memref<9x8x4xbf16, #tpu.memory_space<vmem>>, vector<1x8x4xbf16>
    %61 = vector.shape_cast %60 : vector<1x8x4xbf16> to vector<8x4xbf16>
    %cst_45 = arith.constant dense<0.000000e+00> : vector<8x256xf32>
    %62 = tpu.matmul %61, %59, %cst_45 {dimension_numbers = #tpu.dot_dimension_numbers<[1], [0], [0], [1], [0, 0, 1, 1], [], []>} : vector<8x4xbf16>, vector<4x256xbf16>, vector<8x256xf32> -> vector<8x256xf32>
    %63 = arith.addf %54, %62 : vector<8x256xf32>
    %c0_46 = arith.constant 0 : index
    %c144 = arith.constant 144 : index
    %64 = vector.load %arg13[%c0_46, %c144] : memref<4x512xf32, #tpu.memory_space<vmem>>, vector<4x256xf32>
    %65 = arith.truncf %64 : vector<4x256xf32> to vector<4x256xbf16>
    %c7 = arith.constant 7 : index
    %c0_47 = arith.constant 0 : index
    %c0_48 = arith.constant 0 : index
    %66 = vector.load %arg3[%c7, %c0_47, %c0_48] : memref<9x8x4xbf16, #tpu.memory_space<vmem>>, vector<1x8x4xbf16>
    %67 = vector.shape_cast %66 : vector<1x8x4xbf16> to vector<8x4xbf16>
    %cst_49 = arith.constant dense<0.000000e+00> : vector<8x256xf32>
    %68 = tpu.matmul %67, %65, %cst_49 {dimension_numbers = #tpu.dot_dimension_numbers<[1], [0], [0], [1], [0, 0, 1, 1], [], []>} : vector<8x4xbf16>, vector<4x256xbf16>, vector<8x256xf32> -> vector<8x256xf32>
    %69 = arith.addf %63, %68 : vector<8x256xf32>
    %c0_50 = arith.constant 0 : index
    %c145 = arith.constant 145 : index
    %70 = vector.load %arg13[%c0_50, %c145] : memref<4x512xf32, #tpu.memory_space<vmem>>, vector<4x256xf32>
    %c4_51 = arith.constant 4 : index
    %c0_52 = arith.constant 0 : index
    %71 = vector.load %arg2[%c4_51, %c0_52] : memref<8x256xf32, #tpu.memory_space<vmem>>, vector<1x256xf32>
    %72 = vector.broadcast %71 : vector<1x256xf32> to vector<4x256xf32>
    %73 = arith.mulf %70, %72 : vector<4x256xf32>
    %74 = arith.truncf %73 : vector<4x256xf32> to vector<4x256xbf16>
    %c8 = arith.constant 8 : index
    %c0_53 = arith.constant 0 : index
    %c0_54 = arith.constant 0 : index
    %75 = vector.load %arg3[%c8, %c0_53, %c0_54] : memref<9x8x4xbf16, #tpu.memory_space<vmem>>, vector<1x8x4xbf16>
    %76 = vector.shape_cast %75 : vector<1x8x4xbf16> to vector<8x4xbf16>
    %cst_55 = arith.constant dense<0.000000e+00> : vector<8x256xf32>
    %77 = tpu.matmul %76, %74, %cst_55 {dimension_numbers = #tpu.dot_dimension_numbers<[1], [0], [0], [1], [0, 0, 1, 1], [], []>} : vector<8x4xbf16>, vector<4x256xbf16>, vector<8x256xf32> -> vector<8x256xf32>
    %78 = arith.addf %69, %77 : vector<8x256xf32>
    %c0_56 = arith.constant 0 : index
    %c0_57 = arith.constant 0 : index
    %79 = vector.load %arg4[%c0_56, %c0_57] : memref<8x1xf32, #tpu.memory_space<vmem>>, vector<8x1xf32>
    %80 = vector.broadcast %79 : vector<8x1xf32> to vector<8x256xf32>
    %81 = arith.mulf %78, %80 : vector<8x256xf32>
    %c0_58 = arith.constant 0 : index
    %c0_59 = arith.constant 0 : index
    %82 = vector.load %arg5[%c0_58, %c0_59] : memref<8x1xf32, #tpu.memory_space<vmem>>, vector<8x1xf32>
    %83 = vector.broadcast %82 : vector<8x1xf32> to vector<8x256xf32>
    %84 = arith.addf %81, %83 : vector<8x256xf32>
    %cst_60 = arith.constant 0.000000e+00 : f32
    %85 = vector.broadcast %cst_60 : f32 to vector<8x256xf32>
    %86 = arith.maximumf %84, %85 : vector<8x256xf32>
    %87 = arith.truncf %86 : vector<8x256xf32> to vector<8x256xbf16>
    %88 = arith.extf %87 : vector<8x256xbf16> to vector<8x256xf32>
    %cst_61 = arith.constant 0.000000e+00 : f32
    %89 = vector.broadcast %cst_61 : f32 to vector<8x1024xf32>
    %c0_62 = arith.constant 0 : index
    %c0_63 = arith.constant 0 : index
    %90 = vector.load %arg14[%c0_62, %c0_63] : memref<8x1024xf32, #tpu.memory_space<vmem>>, vector<8x1024xf32>
    tpu.vector_store %arg14[%c0_62, %c0_63], %89 {strides = array<i32>} : memref<8x1024xf32, #tpu.memory_space<vmem>>, vector<8x1024xf32>,
    %c0_64 = arith.constant 0 : index
    %c384 = arith.constant 384 : index
    %91 = vector.load %arg14[%c0_64, %c384] : memref<8x1024xf32, #tpu.memory_space<vmem>>, vector<8x256xf32>
    tpu.vector_store %arg14[%c0_64, %c384], %88 {strides = array<i32>} : memref<8x1024xf32, #tpu.memory_space<vmem>>, vector<8x256xf32>,
    %c0_65 = arith.constant 0 : index
    %c384_66 = arith.constant 384 : index
    %92 = vector.load %arg14[%c0_65, %c384_66] : memref<8x1024xf32, #tpu.memory_space<vmem>>, vector<8x256xf32>
    %c0_67 = arith.constant 0 : index
    %c0_68 = arith.constant 0 : index
    %93 = vector.load %arg15[%c0_67, %c0_68] : memref<208x256xf32, #tpu.memory_space<vmem>>, vector<8x256xf32>
    tpu.vector_store %arg15[%c0_67, %c0_68], %92 {strides = array<i32>} : memref<208x256xf32, #tpu.memory_space<vmem>>, vector<8x256xf32>,
    %c0_69 = arith.constant 0 : index
    %c282 = arith.constant 282 : index
    %94 = vector.load %arg14[%c0_69, %c282] : memref<8x1024xf32, #tpu.memory_space<vmem>>, vector<8x256xf32>
    %c2_70 = arith.constant 2 : index
    %c0_71 = arith.constant 0 : index
    %95 = vector.load %arg2[%c2_70, %c0_71] : memref<8x256xf32, #tpu.memory_space<vmem>>, vector<1x256xf32>
    %96 = vector.broadcast %95 : vector<1x256xf32> to vector<8x256xf32>
    %97 = arith.mulf %94, %96 : vector<8x256xf32>
    %c8_72 = arith.constant 8 : index
    %c0_73 = arith.constant 0 : index
    %98 = vector.load %arg15[%c8_72, %c0_73] : memref<208x256xf32, #tpu.memory_space<vmem>>, vector<8x256xf32>
    tpu.vector_store %arg15[%c8_72, %c0_73], %97 {strides = array<i32>} : memref<208x256xf32, #tpu.memory_space<vmem>>, vector<8x256xf32>,
    %c0_74 = arith.constant 0 : index
    %c288 = arith.constant 288 : index
    %99 = vector.load %arg14[%c0_74, %c288] : memref<8x1024xf32, #tpu.memory_space<vmem>>, vector<8x256xf32>
    %c16 = arith.constant 16 : index
    %c0_75 = arith.constant 0 : index
    %100 = vector.load %arg15[%c16, %c0_75] : memref<208x256xf32, #tpu.memory_space<vmem>>, vector<8x256xf32>
    tpu.vector_store %arg15[%c16, %c0_75], %99 {strides = array<i32>} : memref<208x256xf32, #tpu.memory_space<vmem>>, vector<8x256xf32>,
    %c0_76 = arith.constant 0 : index
    %c294 = arith.constant 294 : index
    %101 = vector.load %arg14[%c0_76, %c294] : memref<8x1024xf32, #tpu.memory_space<vmem>>, vector<8x256xf32>
    %c5_77 = arith.constant 5 : index
    %c0_78 = arith.constant 0 : index
    %102 = vector.load %arg2[%c5_77, %c0_78] : memref<8x256xf32, #tpu.memory_space<vmem>>, vector<1x256xf32>
    %103 = vector.broadcast %102 : vector<1x256xf32> to vector<8x256xf32>
    %104 = arith.mulf %101, %103 : vector<8x256xf32>
    %c24 = arith.constant 24 : index
    %c0_79 = arith.constant 0 : index
    %105 = vector.load %arg15[%c24, %c0_79] : memref<208x256xf32, #tpu.memory_space<vmem>>, vector<8x256xf32>
    tpu.vector_store %arg15[%c24, %c0_79], %104 {strides = array<i32>} : memref<208x256xf32, #tpu.memory_space<vmem>>, vector<8x256xf32>,
    %c0_80 = arith.constant 0 : index
    %c378 = arith.constant 378 : index
    %106 = vector.load %arg14[%c0_80, %c378] : memref<8x1024xf32, #tpu.memory_space<vmem>>, vector<8x256xf32>
    %c2_81 = arith.constant 2 : index
    %c0_82 = arith.constant 0 : index
    %107 = vector.load %arg2[%c2_81, %c0_82] : memref<8x256xf32, #tpu.memory_space<vmem>>, vector<1x256xf32>
    %108 = vector.broadcast %107 : vector<1x256xf32> to vector<8x256xf32>
    %109 = arith.mulf %106, %108 : vector<8x256xf32>
    %c32 = arith.constant 32 : index
    %c0_83 = arith.constant 0 : index
    %110 = vector.load %arg15[%c32, %c0_83] : memref<208x256xf32, #tpu.memory_space<vmem>>, vector<8x256xf32>
    tpu.vector_store %arg15[%c32, %c0_83], %109 {strides = array<i32>} : memref<208x256xf32, #tpu.memory_space<vmem>>, vector<8x256xf32>,
    %c0_84 = arith.constant 0 : index
    %c390 = arith.constant 390 : index
    %111 = vector.load %arg14[%c0_84, %c390] : memref<8x1024xf32, #tpu.memory_space<vmem>>, vector<8x256xf32>
    %c5_85 = arith.constant 5 : index
    %c0_86 = arith.constant 0 : index
    %112 = vector.load %arg2[%c5_85, %c0_86] : memref<8x256xf32, #tpu.memory_space<vmem>>, vector<1x256xf32>
    %113 = vector.broadcast %112 : vector<1x256xf32> to vector<8x256xf32>
    %114 = arith.mulf %111, %113 : vector<8x256xf32>
    %c40 = arith.constant 40 : index
    %c0_87 = arith.constant 0 : index
    %115 = vector.load %arg15[%c40, %c0_87] : memref<208x256xf32, #tpu.memory_space<vmem>>, vector<8x256xf32>
    tpu.vector_store %arg15[%c40, %c0_87], %114 {strides = array<i32>} : memref<208x256xf32, #tpu.memory_space<vmem>>, vector<8x256xf32>,
    %c0_88 = arith.constant 0 : index
    %c474 = arith.constant 474 : index
    %116 = vector.load %arg14[%c0_88, %c474] : memref<8x1024xf32, #tpu.memory_space<vmem>>, vector<8x256xf32>
    %c2_89 = arith.constant 2 : index
    %c0_90 = arith.constant 0 : index
    %117 = vector.load %arg2[%c2_89, %c0_90] : memref<8x256xf32, #tpu.memory_space<vmem>>, vector<1x256xf32>
    %118 = vector.broadcast %117 : vector<1x256xf32> to vector<8x256xf32>
    %119 = arith.mulf %116, %118 : vector<8x256xf32>
    %c48 = arith.constant 48 : index
    %c0_91 = arith.constant 0 : index
    %120 = vector.load %arg15[%c48, %c0_91] : memref<208x256xf32, #tpu.memory_space<vmem>>, vector<8x256xf32>
    tpu.vector_store %arg15[%c48, %c0_91], %119 {strides = array<i32>} : memref<208x256xf32, #tpu.memory_space<vmem>>, vector<8x256xf32>,
    %c0_92 = arith.constant 0 : index
    %c480 = arith.constant 480 : index
    %121 = vector.load %arg14[%c0_92, %c480] : memref<8x1024xf32, #tpu.memory_space<vmem>>, vector<8x256xf32>
    %c56 = arith.constant 56 : index
    %c0_93 = arith.constant 0 : index
    %122 = vector.load %arg15[%c56, %c0_93] : memref<208x256xf32, #tpu.memory_space<vmem>>, vector<8x256xf32>
    tpu.vector_store %arg15[%c56, %c0_93], %121 {strides = array<i32>} : memref<208x256xf32, #tpu.memory_space<vmem>>, vector<8x256xf32>,
    %c0_94 = arith.constant 0 : index
    %c486 = arith.constant 486 : index
    %123 = vector.load %arg14[%c0_94, %c486] : memref<8x1024xf32, #tpu.memory_space<vmem>>, vector<8x256xf32>
    %c5_95 = arith.constant 5 : index
    %c0_96 = arith.constant 0 : index
    %124 = vector.load %arg2[%c5_95, %c0_96] : memref<8x256xf32, #tpu.memory_space<vmem>>, vector<1x256xf32>
    %125 = vector.broadcast %124 : vector<1x256xf32> to vector<8x256xf32>
    %126 = arith.mulf %123, %125 : vector<8x256xf32>
    %c64 = arith.constant 64 : index
    %c0_97 = arith.constant 0 : index
    %127 = vector.load %arg15[%c64, %c0_97] : memref<208x256xf32, #tpu.memory_space<vmem>>, vector<8x256xf32>
    tpu.vector_store %arg15[%c64, %c0_97], %126 {strides = array<i32>} : memref<208x256xf32, #tpu.memory_space<vmem>>, vector<8x256xf32>,
    %c0_98 = arith.constant 0 : index
    %c180 = arith.constant 180 : index
    %128 = vector.load %arg14[%c0_98, %c180] : memref<8x1024xf32, #tpu.memory_space<vmem>>, vector<8x256xf32>
    %c1_99 = arith.constant 1 : index
    %c0_100 = arith.constant 0 : index
    %129 = vector.load %arg2[%c1_99, %c0_100] : memref<8x256xf32, #tpu.memory_space<vmem>>, vector<1x256xf32>
    %130 = vector.broadcast %129 : vector<1x256xf32> to vector<8x256xf32>
    %131 = arith.mulf %128, %130 : vector<8x256xf32>
    %c72 = arith.constant 72 : index
    %c0_101 = arith.constant 0 : index
    %132 = vector.load %arg15[%c72, %c0_101] : memref<208x256xf32, #tpu.memory_space<vmem>>, vector<8x256xf32>
    tpu.vector_store %arg15[%c72, %c0_101], %131 {strides = array<i32>} : memref<208x256xf32, #tpu.memory_space<vmem>>, vector<8x256xf32>,
    %c0_102 = arith.constant 0 : index
    %c192 = arith.constant 192 : index
    %133 = vector.load %arg14[%c0_102, %c192] : memref<8x1024xf32, #tpu.memory_space<vmem>>, vector<8x256xf32>
    %c80 = arith.constant 80 : index
    %c0_103 = arith.constant 0 : index
    %134 = vector.load %arg15[%c80, %c0_103] : memref<208x256xf32, #tpu.memory_space<vmem>>, vector<8x256xf32>
    tpu.vector_store %arg15[%c80, %c0_103], %133 {strides = array<i32>} : memref<208x256xf32, #tpu.memory_space<vmem>>, vector<8x256xf32>,
    %c0_104 = arith.constant 0 : index
    %c204 = arith.constant 204 : index
    %135 = vector.load %arg14[%c0_104, %c204] : memref<8x1024xf32, #tpu.memory_space<vmem>>, vector<8x256xf32>
    %c6_105 = arith.constant 6 : index
    %c0_106 = arith.constant 0 : index
    %136 = vector.load %arg2[%c6_105, %c0_106] : memref<8x256xf32, #tpu.memory_space<vmem>>, vector<1x256xf32>
    %137 = vector.broadcast %136 : vector<1x256xf32> to vector<8x256xf32>
    %138 = arith.mulf %135, %137 : vector<8x256xf32>
    %c88 = arith.constant 88 : index
    %c0_107 = arith.constant 0 : index
    %139 = vector.load %arg15[%c88, %c0_107] : memref<208x256xf32, #tpu.memory_space<vmem>>, vector<8x256xf32>
    tpu.vector_store %arg15[%c88, %c0_107], %138 {strides = array<i32>} : memref<208x256xf32, #tpu.memory_space<vmem>>, vector<8x256xf32>,
    %c0_108 = arith.constant 0 : index
    %c372 = arith.constant 372 : index
    %140 = vector.load %arg14[%c0_108, %c372] : memref<8x1024xf32, #tpu.memory_space<vmem>>, vector<8x256xf32>
    %c1_109 = arith.constant 1 : index
    %c0_110 = arith.constant 0 : index
    %141 = vector.load %arg2[%c1_109, %c0_110] : memref<8x256xf32, #tpu.memory_space<vmem>>, vector<1x256xf32>
    %142 = vector.broadcast %141 : vector<1x256xf32> to vector<8x256xf32>
    %143 = arith.mulf %140, %142 : vector<8x256xf32>
    %c96 = arith.constant 96 : index
    %c0_111 = arith.constant 0 : index
    %144 = vector.load %arg15[%c96, %c0_111] : memref<208x256xf32, #tpu.memory_space<vmem>>, vector<8x256xf32>
    tpu.vector_store %arg15[%c96, %c0_111], %143 {strides = array<i32>} : memref<208x256xf32, #tpu.memory_space<vmem>>, vector<8x256xf32>,
    %c0_112 = arith.constant 0 : index
    %c396 = arith.constant 396 : index
    %145 = vector.load %arg14[%c0_112, %c396] : memref<8x1024xf32, #tpu.memory_space<vmem>>, vector<8x256xf32>
    %c6_113 = arith.constant 6 : index
    %c0_114 = arith.constant 0 : index
    %146 = vector.load %arg2[%c6_113, %c0_114] : memref<8x256xf32, #tpu.memory_space<vmem>>, vector<1x256xf32>
    %147 = vector.broadcast %146 : vector<1x256xf32> to vector<8x256xf32>
    %148 = arith.mulf %145, %147 : vector<8x256xf32>
    %c104 = arith.constant 104 : index
    %c0_115 = arith.constant 0 : index
    %149 = vector.load %arg15[%c104, %c0_115] : memref<208x256xf32, #tpu.memory_space<vmem>>, vector<8x256xf32>
    tpu.vector_store %arg15[%c104, %c0_115], %148 {strides = array<i32>} : memref<208x256xf32, #tpu.memory_space<vmem>>, vector<8x256xf32>,
    %c0_116 = arith.constant 0 : index
    %c564 = arith.constant 564 : index
    %150 = vector.load %arg14[%c0_116, %c564] : memref<8x1024xf32, #tpu.memory_space<vmem>>, vector<8x256xf32>
    %c1_117 = arith.constant 1 : index
    %c0_118 = arith.constant 0 : index
    %151 = vector.load %arg2[%c1_117, %c0_118] : memref<8x256xf32, #tpu.memory_space<vmem>>, vector<1x256xf32>
    %152 = vector.broadcast %151 : vector<1x256xf32> to vector<8x256xf32>
    %153 = arith.mulf %150, %152 : vector<8x256xf32>
    %c112_119 = arith.constant 112 : index
    %c0_120 = arith.constant 0 : index
    %154 = vector.load %arg15[%c112_119, %c0_120] : memref<208x256xf32, #tpu.memory_space<vmem>>, vector<8x256xf32>
    tpu.vector_store %arg15[%c112_119, %c0_120], %153 {strides = array<i32>} : memref<208x256xf32, #tpu.memory_space<vmem>>, vector<8x256xf32>,
    %c0_121 = arith.constant 0 : index
    %c576 = arith.constant 576 : index
    %155 = vector.load %arg14[%c0_121, %c576] : memref<8x1024xf32, #tpu.memory_space<vmem>>, vector<8x256xf32>
    %c120 = arith.constant 120 : index
    %c0_122 = arith.constant 0 : index
    %156 = vector.load %arg15[%c120, %c0_122] : memref<208x256xf32, #tpu.memory_space<vmem>>, vector<8x256xf32>
    tpu.vector_store %arg15[%c120, %c0_122], %155 {strides = array<i32>} : memref<208x256xf32, #tpu.memory_space<vmem>>, vector<8x256xf32>,
    %c0_123 = arith.constant 0 : index
    %c588 = arith.constant 588 : index
    %157 = vector.load %arg14[%c0_123, %c588] : memref<8x1024xf32, #tpu.memory_space<vmem>>, vector<8x256xf32>
    %c6_124 = arith.constant 6 : index
    %c0_125 = arith.constant 0 : index
    %158 = vector.load %arg2[%c6_124, %c0_125] : memref<8x256xf32, #tpu.memory_space<vmem>>, vector<1x256xf32>
    %159 = vector.broadcast %158 : vector<1x256xf32> to vector<8x256xf32>
    %160 = arith.mulf %157, %159 : vector<8x256xf32>
    %c128_126 = arith.constant 128 : index
    %c0_127 = arith.constant 0 : index
    %161 = vector.load %arg15[%c128_126, %c0_127] : memref<208x256xf32, #tpu.memory_space<vmem>>, vector<8x256xf32>
    tpu.vector_store %arg15[%c128_126, %c0_127], %160 {strides = array<i32>} : memref<208x256xf32, #tpu.memory_space<vmem>>, vector<8x256xf32>,
    %c0_128 = arith.constant 0 : index
    %c78 = arith.constant 78 : index
    %162 = vector.load %arg14[%c0_128, %c78] : memref<8x1024xf32, #tpu.memory_space<vmem>>, vector<8x256xf32>
    %c0_129 = arith.constant 0 : index
    %c0_130 = arith.constant 0 : index
    %163 = vector.load %arg2[%c0_129, %c0_130] : memref<8x256xf32, #tpu.memory_space<vmem>>, vector<1x256xf32>
    %164 = vector.broadcast %163 : vector<1x256xf32> to vector<8x256xf32>
    %165 = arith.mulf %162, %164 : vector<8x256xf32>
    %c136 = arith.constant 136 : index
    %c0_131 = arith.constant 0 : index
    %166 = vector.load %arg15[%c136, %c0_131] : memref<208x256xf32, #tpu.memory_space<vmem>>, vector<8x256xf32>
    tpu.vector_store %arg15[%c136, %c0_131], %165 {strides = array<i32>} : memref<208x256xf32, #tpu.memory_space<vmem>>, vector<8x256xf32>,
    %c0_132 = arith.constant 0 : index
    %c96_133 = arith.constant 96 : index
    %167 = vector.load %arg14[%c0_132, %c96_133] : memref<8x1024xf32, #tpu.memory_space<vmem>>, vector<8x256xf32>
    %c144_134 = arith.constant 144 : index
    %c0_135 = arith.constant 0 : index
    %168 = vector.load %arg15[%c144_134, %c0_135] : memref<208x256xf32, #tpu.memory_space<vmem>>, vector<8x256xf32>
    tpu.vector_store %arg15[%c144_134, %c0_135], %167 {strides = array<i32>} : memref<208x256xf32, #tpu.memory_space<vmem>>, vector<8x256xf32>,
    %c0_136 = arith.constant 0 : index
    %c114 = arith.constant 114 : index
    %169 = vector.load %arg14[%c0_136, %c114] : memref<8x1024xf32, #tpu.memory_space<vmem>>, vector<8x256xf32>
    %c7_137 = arith.constant 7 : index
    %c0_138 = arith.constant 0 : index
    %170 = vector.load %arg2[%c7_137, %c0_138] : memref<8x256xf32, #tpu.memory_space<vmem>>, vector<1x256xf32>
    %171 = vector.broadcast %170 : vector<1x256xf32> to vector<8x256xf32>
    %172 = arith.mulf %169, %171 : vector<8x256xf32>
    %c152 = arith.constant 152 : index
    %c0_139 = arith.constant 0 : index
    %173 = vector.load %arg15[%c152, %c0_139] : memref<208x256xf32, #tpu.memory_space<vmem>>, vector<8x256xf32>
    tpu.vector_store %arg15[%c152, %c0_139], %172 {strides = array<i32>} : memref<208x256xf32, #tpu.memory_space<vmem>>, vector<8x256xf32>,
    %c0_140 = arith.constant 0 : index
    %c366 = arith.constant 366 : index
    %174 = vector.load %arg14[%c0_140, %c366] : memref<8x1024xf32, #tpu.memory_space<vmem>>, vector<8x256xf32>
    %c0_141 = arith.constant 0 : index
    %c0_142 = arith.constant 0 : index
    %175 = vector.load %arg2[%c0_141, %c0_142] : memref<8x256xf32, #tpu.memory_space<vmem>>, vector<1x256xf32>
    %176 = vector.broadcast %175 : vector<1x256xf32> to vector<8x256xf32>
    %177 = arith.mulf %174, %176 : vector<8x256xf32>
    %c160 = arith.constant 160 : index
    %c0_143 = arith.constant 0 : index
    %178 = vector.load %arg15[%c160, %c0_143] : memref<208x256xf32, #tpu.memory_space<vmem>>, vector<8x256xf32>
    tpu.vector_store %arg15[%c160, %c0_143], %177 {strides = array<i32>} : memref<208x256xf32, #tpu.memory_space<vmem>>, vector<8x256xf32>,
    %c0_144 = arith.constant 0 : index
    %c402 = arith.constant 402 : index
    %179 = vector.load %arg14[%c0_144, %c402] : memref<8x1024xf32, #tpu.memory_space<vmem>>, vector<8x256xf32>
    %c7_145 = arith.constant 7 : index
    %c0_146 = arith.constant 0 : index
    %180 = vector.load %arg2[%c7_145, %c0_146] : memref<8x256xf32, #tpu.memory_space<vmem>>, vector<1x256xf32>
    %181 = vector.broadcast %180 : vector<1x256xf32> to vector<8x256xf32>
    %182 = arith.mulf %179, %181 : vector<8x256xf32>
    %c168 = arith.constant 168 : index
    %c0_147 = arith.constant 0 : index
    %183 = vector.load %arg15[%c168, %c0_147] : memref<208x256xf32, #tpu.memory_space<vmem>>, vector<8x256xf32>
    tpu.vector_store %arg15[%c168, %c0_147], %182 {strides = array<i32>} : memref<208x256xf32, #tpu.memory_space<vmem>>, vector<8x256xf32>,
    %c0_148 = arith.constant 0 : index
    %c654 = arith.constant 654 : index
    %184 = vector.load %arg14[%c0_148, %c654] : memref<8x1024xf32, #tpu.memory_space<vmem>>, vector<8x256xf32>
    %c0_149 = arith.constant 0 : index
    %c0_150 = arith.constant 0 : index
    %185 = vector.load %arg2[%c0_149, %c0_150] : memref<8x256xf32, #tpu.memory_space<vmem>>, vector<1x256xf32>
    %186 = vector.broadcast %185 : vector<1x256xf32> to vector<8x256xf32>
    %187 = arith.mulf %184, %186 : vector<8x256xf32>
    %c176 = arith.constant 176 : index
    %c0_151 = arith.constant 0 : index
    %188 = vector.load %arg15[%c176, %c0_151] : memref<208x256xf32, #tpu.memory_space<vmem>>, vector<8x256xf32>
    tpu.vector_store %arg15[%c176, %c0_151], %187 {strides = array<i32>} : memref<208x256xf32, #tpu.memory_space<vmem>>, vector<8x256xf32>,
    %c0_152 = arith.constant 0 : index
    %c672 = arith.constant 672 : index
    %189 = vector.load %arg14[%c0_152, %c672] : memref<8x1024xf32, #tpu.memory_space<vmem>>, vector<8x256xf32>
    %c184 = arith.constant 184 : index
    %c0_153 = arith.constant 0 : index
    %190 = vector.load %arg15[%c184, %c0_153] : memref<208x256xf32, #tpu.memory_space<vmem>>, vector<8x256xf32>
    tpu.vector_store %arg15[%c184, %c0_153], %189 {strides = array<i32>} : memref<208x256xf32, #tpu.memory_space<vmem>>, vector<8x256xf32>,
    %c0_154 = arith.constant 0 : index
    %c690 = arith.constant 690 : index
    %191 = vector.load %arg14[%c0_154, %c690] : memref<8x1024xf32, #tpu.memory_space<vmem>>, vector<8x256xf32>
    %c7_155 = arith.constant 7 : index
    %c0_156 = arith.constant 0 : index
    %192 = vector.load %arg2[%c7_155, %c0_156] : memref<8x256xf32, #tpu.memory_space<vmem>>, vector<1x256xf32>
    %193 = vector.broadcast %192 : vector<1x256xf32> to vector<8x256xf32>
    %194 = arith.mulf %191, %193 : vector<8x256xf32>
    %c192_157 = arith.constant 192 : index
    %c0_158 = arith.constant 0 : index
    %195 = vector.load %arg15[%c192_157, %c0_158] : memref<208x256xf32, #tpu.memory_space<vmem>>, vector<8x256xf32>
    tpu.vector_store %arg15[%c192_157, %c0_158], %194 {strides = array<i32>} : memref<208x256xf32, #tpu.memory_space<vmem>>, vector<8x256xf32>,
    %cst_159 = arith.constant dense<0.000000e+00> : vector<8xf32>
    %196 = vector.multi_reduction <add>, %88, %cst_159 [1] : vector<8x256xf32> to vector<8xf32>
    %197 = vector.shape_cast %196 : vector<8xf32> to vector<8x1xf32>
    %cst_160 = arith.constant 2.560000e+02 : f32
    %198 = vector.broadcast %cst_160 : f32 to vector<8x1xf32>
    %199 = arith.divf %197, %198 : vector<8x1xf32>
    %200 = vector.shape_cast %199 : vector<8x1xf32> to vector<8x1xf32>
    %201 = vector.broadcast %200 : vector<8x1xf32> to vector<8x256xf32>
    %c200 = arith.constant 200 : index
    %c0_161 = arith.constant 0 : index
    %202 = vector.load %arg15[%c200, %c0_161] : memref<208x256xf32, #tpu.memory_space<vmem>>, vector<8x256xf32>
    tpu.vector_store %arg15[%c200, %c0_161], %201 {strides = array<i32>} : memref<208x256xf32, #tpu.memory_space<vmem>>, vector<8x256xf32>,
    %c0_162 = arith.constant 0 : index
    %c0_163 = arith.constant 0 : index
    %203 = vector.load %arg6[%c0_162, %c0_163] : memref<40x208xbf16, #tpu.memory_space<vmem>>, vector<40x208xbf16>
    %c0_164 = arith.constant 0 : index
    %c0_165 = arith.constant 0 : index
    %204 = vector.load %arg15[%c0_164, %c0_165] : memref<208x256xf32, #tpu.memory_space<vmem>>, vector<208x256xf32>
    %205 = arith.truncf %204 : vector<208x256xf32> to vector<208x256xbf16>
    %cst_166 = arith.constant dense<0.000000e+00> : vector<40x256xf32>
    %206 = tpu.matmul %203, %205, %cst_166 {dimension_numbers = #tpu.dot_dimension_numbers<[1], [0], [0], [1], [0, 0, 1, 1], [], []>} : vector<40x208xbf16>, vector<208x256xbf16>, vector<40x256xf32> -> vector<40x256xf32>
    %c0_167 = arith.constant 0 : index
    %c0_168 = arith.constant 0 : index
    %207 = vector.load %arg7[%c0_167, %c0_168] : memref<40x1xf32, #tpu.memory_space<vmem>>, vector<40x1xf32>
    %208 = vector.broadcast %207 : vector<40x1xf32> to vector<40x256xf32>
    %209 = arith.mulf %206, %208 : vector<40x256xf32>
    %c0_169 = arith.constant 0 : index
    %c0_170 = arith.constant 0 : index
    %210 = vector.load %arg8[%c0_169, %c0_170] : memref<40x1xf32, #tpu.memory_space<vmem>>, vector<40x1xf32>
    %211 = vector.broadcast %210 : vector<40x1xf32> to vector<40x256xf32>
    %212 = arith.addf %209, %211 : vector<40x256xf32>
    %cst_171 = arith.constant 0.000000e+00 : f32
    %213 = vector.broadcast %cst_171 : f32 to vector<40x256xf32>
    %214 = arith.maximumf %212, %213 : vector<40x256xf32>
    %c0_172 = arith.constant 0 : index
    %c0_173 = arith.constant 0 : index
    %215 = vector.load %arg9[%c0_172, %c0_173] : memref<8x40xbf16, #tpu.memory_space<vmem>>, vector<8x40xbf16>
    %216 = arith.truncf %214 : vector<40x256xf32> to vector<40x256xbf16>
    %cst_174 = arith.constant dense<0.000000e+00> : vector<8x256xf32>
    %217 = tpu.matmul %215, %216, %cst_174 {dimension_numbers = #tpu.dot_dimension_numbers<[1], [0], [0], [1], [0, 0, 1, 1], [], []>} : vector<8x40xbf16>, vector<40x256xbf16>, vector<8x256xf32> -> vector<8x256xf32>
    %c0_175 = arith.constant 0 : index
    %c0_176 = arith.constant 0 : index
    %218 = vector.load %arg10[%c0_175, %c0_176] : memref<8x1xf32, #tpu.memory_space<vmem>>, vector<8x1xf32>
    %219 = vector.broadcast %218 : vector<8x1xf32> to vector<8x256xf32>
    %220 = arith.mulf %217, %219 : vector<8x256xf32>
    %c0_177 = arith.constant 0 : index
    %c0_178 = arith.constant 0 : index
    %221 = vector.load %arg11[%c0_177, %c0_178] : memref<8x1xf32, #tpu.memory_space<vmem>>, vector<8x1xf32>
    %222 = vector.broadcast %221 : vector<8x1xf32> to vector<8x256xf32>
    %223 = arith.addf %220, %222 : vector<8x256xf32>
    %cst_179 = arith.constant 0.000000e+00 : f32
    %224 = vector.broadcast %cst_179 : f32 to vector<8x256xf32>
    %225 = arith.maximumf %223, %224 : vector<8x256xf32>
    %226 = vector.shape_cast %225 : vector<8x256xf32> to vector<1x8x256xf32>
    %c0_180 = arith.constant 0 : index
    %c0_181 = arith.constant 0 : index
    %c0_182 = arith.constant 0 : index
    %227 = vector.load %arg12[%c0_180, %c0_181, %c0_182] : memref<1x8x256xf32, #tpu.memory_space<vmem>>, vector<1x8x256xf32>
    tpu.vector_store %arg12[%c0_180, %c0_181, %c0_182], %226 {strides = array<i32>} : memref<1x8x256xf32, #tpu.memory_space<vmem>>, vector<1x8x256xf32>,
    return
  }
  func.func @transform_0(%arg0: i32) -> (i32, i32, i32) {
    %c0_i32 = arith.constant 0 : i32
    %c0_i32_0 = arith.constant 0 : i32
    %c0_i32_1 = arith.constant 0 : i32
    return %arg0, %c0_i32, %c0_i32_0 : i32, i32, i32
  }
  func.func @transform_1(%arg0: i32) -> (i32, i32) {
    %c0_i32 = arith.constant 0 : i32
    %c0_i32_0 = arith.constant 0 : i32
    %c0_i32_1 = arith.constant 0 : i32
    return %c0_i32, %c0_i32_0 : i32, i32
  }
  func.func @transform_2(%arg0: i32) -> (i32, i32, i32) {
    %c0_i32 = arith.constant 0 : i32
    %c0_i32_0 = arith.constant 0 : i32
    %c0_i32_1 = arith.constant 0 : i32
    %c0_i32_2 = arith.constant 0 : i32
    return %c0_i32, %c0_i32_0, %c0_i32_1 : i32, i32, i32
  }
  func.func @transform_3(%arg0: i32) -> (i32, i32) {
    %c0_i32 = arith.constant 0 : i32
    %c0_i32_0 = arith.constant 0 : i32
    %c0_i32_1 = arith.constant 0 : i32
    return %c0_i32, %c0_i32_0 : i32, i32
  }
  func.func @transform_4(%arg0: i32) -> (i32, i32) {
    %c0_i32 = arith.constant 0 : i32
    %c0_i32_0 = arith.constant 0 : i32
    %c0_i32_1 = arith.constant 0 : i32
    return %c0_i32, %c0_i32_0 : i32, i32
  }
  func.func @transform_5(%arg0: i32) -> (i32, i32) {
    %c0_i32 = arith.constant 0 : i32
    %c0_i32_0 = arith.constant 0 : i32
    %c0_i32_1 = arith.constant 0 : i32
    return %c0_i32, %c0_i32_0 : i32, i32
  }
  func.func @transform_6(%arg0: i32) -> (i32, i32) {
    %c0_i32 = arith.constant 0 : i32
    %c0_i32_0 = arith.constant 0 : i32
    %c0_i32_1 = arith.constant 0 : i32
    return %c0_i32, %c0_i32_0 : i32, i32
  }
  func.func @transform_7(%arg0: i32) -> (i32, i32) {
    %c0_i32 = arith.constant 0 : i32
    %c0_i32_0 = arith.constant 0 : i32
    %c0_i32_1 = arith.constant 0 : i32
    return %c0_i32, %c0_i32_0 : i32, i32
  }
  func.func @transform_8(%arg0: i32) -> (i32, i32) {
    %c0_i32 = arith.constant 0 : i32
    %c0_i32_0 = arith.constant 0 : i32
    %c0_i32_1 = arith.constant 0 : i32
    return %c0_i32, %c0_i32_0 : i32, i32
  }
  func.func @transform_9(%arg0: i32) -> (i32, i32) {
    %c0_i32 = arith.constant 0 : i32
    %c0_i32_0 = arith.constant 0 : i32
    %c0_i32_1 = arith.constant 0 : i32
    return %c0_i32, %c0_i32_0 : i32, i32
  }
  func.func @transform_10(%arg0: i32) -> (i32, i32) {
    %c0_i32 = arith.constant 0 : i32
    %c0_i32_0 = arith.constant 0 : i32
    %c0_i32_1 = arith.constant 0 : i32
    return %c0_i32, %c0_i32_0 : i32, i32
  }
  func.func @transform_11(%arg0: i32) -> (i32, i32, i32) {
    %c0_i32 = arith.constant 0 : i32
    %c0_i32_0 = arith.constant 0 : i32
    %c0_i32_1 = arith.constant 0 : i32
    return %arg0, %c0_i32, %c0_i32_0 : i32, i32, i32
  }
}

</mosaic_0001>

<llo_original>
// kernel: bottleneck_forward.1
$region0: #{bottleneck_forward.1}
  #allocation0 [shape = 'u32[]', space=smem, size = 0x4, offset = 0x4, fixed_abs, tag = 'smem constant byte address 0x4 - core index']
  #allocation1 [shape = 'u32[144,128]{1,0:T(1,128)}', space=vmem, size = 0x12000, scoped, tag = 'internal scratch']
  #allocation2 [shape = 'f32[4,512]{1,0:T(4,128)}', space=vmem, size = 0x2000, scoped, tag = 'scratch operand']
  #allocation3 [shape = 'f32[8,1024]{1,0:T(8,128)}', space=vmem, size = 0x8000, scoped, tag = 'scratch operand']
  #allocation4 [shape = 'f32[208,256]{1,0:T(8,128)}', space=vmem, size = 0x34000, scoped, tag = 'scratch operand']
  %s0 = inlined_call_operand.vmem [shape: bf16[2,4,256], index: 0, kind: input, shape index: {}]
  %s1 = inlined_call_operand.vmem [shape: f32[8,256], index: 1, kind: input, shape index: {}]
  %s2 = inlined_call_operand.vmem [shape: bf16[9,8,4], index: 2, kind: input, shape index: {}]
  %s3 = inlined_call_operand.vmem [shape: f32[8,1], index: 3, kind: input, shape index: {}]
  %s4 = inlined_call_operand.vmem [shape: f32[8,1], index: 4, kind: input, shape index: {}]
  %s5 = inlined_call_operand.vmem [shape: bf16[40,208], index: 5, kind: input, shape index: {}]
  %s6 = inlined_call_operand.vmem [shape: f32[40,1], index: 6, kind: input, shape index: {}]
  %s7 = inlined_call_operand.vmem [shape: f32[40,1], index: 7, kind: input, shape index: {}]
  %s8 = inlined_call_operand.vmem [shape: bf16[8,40], index: 8, kind: input, shape index: {}]
  %s9 = inlined_call_operand.vmem [shape: f32[8,1], index: 9, kind: input, shape index: {}]
  %s10 = inlined_call_operand.vmem [shape: f32[8,1], index: 10, kind: input, shape index: {}]
  %s11 = inlined_call_operand.vmem [shape: f32[2,8,256], index: 11, kind: output, shape index: {}]
  %s12 = sld [smem:[#allocation0]]
  $region77: #{bottleneck_forward.1} parent=0
    _
  %s14 = ssub.s32 1, %s12
  %s15 = scalar_select 0, %s14, %s12
  loop: start=0, step=1, limit=4
  $region2: #{bottleneck_forward.1} parent=0 // loop_pre_header
    _
  $region3: #{bottleneck_forward.1} parent=0 // loop_header
    %s17 = sphi 0, %s21
    %p18 = scmp.ge.s32.totalorder %s17, 4
    %s27 = sphi 0, %s29
    %s30 = sphi 0, %s27
    %s31 = sphi 0, %s30
    %s47 = sphi 0, %s31
    %s51 = sphi 0, %s51
    %s53 = sphi 0, %s51
    %s54 = sphi 0, %s53
    %s68 = sphi 0, %s54
    %s72 = sphi 0, %s72
    %s74 = sphi 0, %s72
    %s75 = sphi 0, %s74
    %s89 = sphi 0, %s75
    %s93 = sphi 0, %s93
    %s95 = sphi 0, %s93
    %s96 = sphi 0, %s95
    %s110 = sphi 0, %s96
    %s114 = sphi 0, %s114
    %s116 = sphi 0, %s114
    %s117 = sphi 0, %s116
    %s131 = sphi 0, %s117
    %s135 = sphi 0, %s135
    %s137 = sphi 0, %s135
    %s138 = sphi 0, %s137
    %s152 = sphi 0, %s138
    %s156 = sphi 0, %s156
    %s158 = sphi 0, %s156
    %s159 = sphi 0, %s158
    %s173 = sphi 0, %s159
    %s177 = sphi 0, %s177
    %s179 = sphi 0, %s177
    %s180 = sphi 0, %s179
    %s194 = sphi 0, %s180
    %s198 = sphi 0, %s198
    %s200 = sphi 0, %s198
    %s201 = sphi 0, %s200
    %s215 = sphi 0, %s201
    %s219 = sphi 0, %s219
    %s221 = sphi 0, %s219
    %s222 = sphi 0, %s221
    %s236 = sphi 0, %s222
    %s240 = sphi 0, %s240
    %s242 = sphi 0, %s240
    %s243 = sphi 0, %s242
    %s257 = sphi 0, %s243
    %s263 = sphi 0, %s265
    %s266 = sphi 0, %s263
    %s267 = sphi 0, %s266
    %s283 = sphi 0, %s267
  $region4: #{bottleneck_forward.1} parent=0 // loop_header_branch
    %20 = sbr.rel (%p18) target = $region8
  $region5: #{bottleneck_forward.1} parent=0 // loop_body
    %s22 = ssub.s32 %s17, 1
    %s23 = ssub.s32 %s17, 2
    %s24 = sadd.s32 %s17, 1
    %s25 = ssub.s32 %s17, %s24
    %p26 = scmp.eq.s32.totalorder %s25, 0
    %s28 = sadd.s32 %s27, 1
    %s29 = scalar_select %p26, %s27, %s28
    %p32 = pneg %p26
    %p33 = scmp.eq.s32.totalorder %s17, 1
    %p34 = por %p32, %p33
    %p35 = scmp.ne.s32.totalorder %s27, %s30
    %p36 = scmp.eq.s32.totalorder %s17, 0
    %p37 = por %p35, %p36
    %p38 = scmp.ne.s32.totalorder %s27, %s30
    %p39 = scmp.eq.s32.totalorder %s22, 1
    %p40 = por %p38, %p39
    %p41 = scmp.ne.s32.totalorder %s30, %s31
    %p42 = scmp.eq.s32.totalorder %s22, 0
    %p43 = por %p41, %p42
    %p44 = scmp.ne.s32.totalorder %s30, %s31
    %p45 = scmp.eq.s32.totalorder %s23, 1
    %p46 = por %p44, %p45
    %p48 = scmp.ne.s32.totalorder %s31, %s47
    %p49 = scmp.eq.s32.totalorder %s23, 0
    %p50 = por %p48, %p49
    %s52 = sadd.s32 %s51, 1
    %p55 = scmp.eq.s32.totalorder %s17, 1
    %p56 = scmp.ne.s32.totalorder %s51, %s53
    %p57 = scmp.eq.s32.totalorder %s17, 0
    %p58 = por %p56, %p57
    %p59 = scmp.ne.s32.totalorder %s51, %s53
    %p60 = scmp.eq.s32.totalorder %s22, 1
    %p61 = por %p59, %p60
    %p62 = scmp.ne.s32.totalorder %s53, %s54
    %p63 = scmp.eq.s32.totalorder %s22, 0
    %p64 = por %p62, %p63
    %p65 = scmp.ne.s32.totalorder %s53, %s54
    %p66 = scmp.eq.s32.totalorder %s23, 1
    %p67 = por %p65, %p66
    %p69 = scmp.ne.s32.totalorder %s54, %s68
    %p70 = scmp.eq.s32.totalorder %s23, 0
    %p71 = por %p69, %p70
    %s73 = sadd.s32 %s72, 1
    %p76 = scmp.eq.s32.totalorder %s17, 1
    %p77 = scmp.ne.s32.totalorder %s72, %s74
    %p78 = scmp.eq.s32.totalorder %s17, 0
    %p79 = por %p77, %p78
    %p80 = scmp.ne.s32.totalorder %s72, %s74
    %p81 = scmp.eq.s32.totalorder %s22, 1
    %p82 = por %p80, %p81
    %p83 = scmp.ne.s32.totalorder %s74, %s75
    %p84 = scmp.eq.s32.totalorder %s22, 0
    %p85 = por %p83, %p84
    %p86 = scmp.ne.s32.totalorder %s74, %s75
    %p87 = scmp.eq.s32.totalorder %s23, 1
    %p88 = por %p86, %p87
    %p90 = scmp.ne.s32.totalorder %s75, %s89
    %p91 = scmp.eq.s32.totalorder %s23, 0
    %p92 = por %p90, %p91
    %s94 = sadd.s32 %s93, 1
    %p97 = scmp.eq.s32.totalorder %s17, 1
    %p98 = scmp.ne.s32.totalorder %s93, %s95
    %p99 = scmp.eq.s32.totalorder %s17, 0
    %p100 = por %p98, %p99
    %p101 = scmp.ne.s32.totalorder %s93, %s95
    %p102 = scmp.eq.s32.totalorder %s22, 1
    %p103 = por %p101, %p102
    %p104 = scmp.ne.s32.totalorder %s95, %s96
    %p105 = scmp.eq.s32.totalorder %s22, 0
    %p106 = por %p104, %p105
    %p107 = scmp.ne.s32.totalorder %s95, %s96
    %p108 = scmp.eq.s32.totalorder %s23, 1
    %p109 = por %p107, %p108
    %p111 = scmp.ne.s32.totalorder %s96, %s110
    %p112 = scmp.eq.s32.totalorder %s23, 0
    %p113 = por %p111, %p112
    %s115 = sadd.s32 %s114, 1
    %p118 = scmp.eq.s32.totalorder %s17, 1
    %p119 = scmp.ne.s32.totalorder %s114, %s116
    %p120 = scmp.eq.s32.totalorder %s17, 0
    %p121 = por %p119, %p120
    %p122 = scmp.ne.s32.totalorder %s114, %s116
    %p123 = scmp.eq.s32.totalorder %s22, 1
    %p124 = por %p122, %p123
    %p125 = scmp.ne.s32.totalorder %s116, %s117
    %p126 = scmp.eq.s32.totalorder %s22, 0
    %p127 = por %p125, %p126
    %p128 = scmp.ne.s32.totalorder %s116, %s117
    %p129 = scmp.eq.s32.totalorder %s23, 1
    %p130 = por %p128, %p129
    %p132 = scmp.ne.s32.totalorder %s117, %s131
    %p133 = scmp.eq.s32.totalorder %s23, 0
    %p134 = por %p132, %p133
    %s136 = sadd.s32 %s135, 1
    %p139 = scmp.eq.s32.totalorder %s17, 1
    %p140 = scmp.ne.s32.totalorder %s135, %s137
    %p141 = scmp.eq.s32.totalorder %s17, 0
    %p142 = por %p140, %p141
    %p143 = scmp.ne.s32.totalorder %s135, %s137
    %p144 = scmp.eq.s32.totalorder %s22, 1
    %p145 = por %p143, %p144
    %p146 = scmp.ne.s32.totalorder %s137, %s138
    %p147 = scmp.eq.s32.totalorder %s22, 0
    %p148 = por %p146, %p147
    %p149 = scmp.ne.s32.totalorder %s137, %s138
    %p150 = scmp.eq.s32.totalorder %s23, 1
    %p151 = por %p149, %p150
    %p153 = scmp.ne.s32.totalorder %s138, %s152
    %p154 = scmp.eq.s32.totalorder %s23, 0
    %p155 = por %p153, %p154
    %s157 = sadd.s32 %s156, 1
    %p160 = scmp.eq.s32.totalorder %s17, 1
    %p161 = scmp.ne.s32.totalorder %s156, %s158
    %p162 = scmp.eq.s32.totalorder %s17, 0
    %p163 = por %p161, %p162
    %p164 = scmp.ne.s32.totalorder %s156, %s158
    %p165 = scmp.eq.s32.totalorder %s22, 1
    %p166 = por %p164, %p165
    %p167 = scmp.ne.s32.totalorder %s158, %s159
    %p168 = scmp.eq.s32.totalorder %s22, 0
    %p169 = por %p167, %p168
    %p170 = scmp.ne.s32.totalorder %s158, %s159
    %p171 = scmp.eq.s32.totalorder %s23, 1
    %p172 = por %p170, %p171
    %p174 = scmp.ne.s32.totalorder %s159, %s173
    %p175 = scmp.eq.s32.totalorder %s23, 0
    %p176 = por %p174, %p175
    %s178 = sadd.s32 %s177, 1
    %p181 = scmp.eq.s32.totalorder %s17, 1
    %p182 = scmp.ne.s32.totalorder %s177, %s179
    %p183 = scmp.eq.s32.totalorder %s17, 0
    %p184 = por %p182, %p183
    %p185 = scmp.ne.s32.totalorder %s177, %s179
    %p186 = scmp.eq.s32.totalorder %s22, 1
    %p187 = por %p185, %p186
    %p188 = scmp.ne.s32.totalorder %s179, %s180
    %p189 = scmp.eq.s32.totalorder %s22, 0
    %p190 = por %p188, %p189
    %p191 = scmp.ne.s32.totalorder %s179, %s180
    %p192 = scmp.eq.s32.totalorder %s23, 1
    %p193 = por %p191, %p192
    %p195 = scmp.ne.s32.totalorder %s180, %s194
    %p196 = scmp.eq.s32.totalorder %s23, 0
    %p197 = por %p195, %p196
    %s199 = sadd.s32 %s198, 1
    %p202 = scmp.eq.s32.totalorder %s17, 1
    %p203 = scmp.ne.s32.totalorder %s198, %s200
    %p204 = scmp.eq.s32.totalorder %s17, 0
    %p205 = por %p203, %p204
    %p206 = scmp.ne.s32.totalorder %s198, %s200
    %p207 = scmp.eq.s32.totalorder %s22, 1
    %p208 = por %p206, %p207
    %p209 = scmp.ne.s32.totalorder %s200, %s201
    %p210 = scmp.eq.s32.totalorder %s22, 0
    %p211 = por %p209, %p210
    %p212 = scmp.ne.s32.totalorder %s200, %s201
    %p213 = scmp.eq.s32.totalorder %s23, 1
    %p214 = por %p212, %p213
    %p216 = scmp.ne.s32.totalorder %s201, %s215
    %p217 = scmp.eq.s32.totalorder %s23, 0
    %p218 = por %p216, %p217
    %s220 = sadd.s32 %s219, 1
    %p223 = scmp.eq.s32.totalorder %s17, 1
    %p224 = scmp.ne.s32.totalorder %s219, %s221
    %p225 = scmp.eq.s32.totalorder %s17, 0
    %p226 = por %p224, %p225
    %p227 = scmp.ne.s32.totalorder %s219, %s221
    %p228 = scmp.eq.s32.totalorder %s22, 1
    %p229 = por %p227, %p228
    %p230 = scmp.ne.s32.totalorder %s221, %s222
    %p231 = scmp.eq.s32.totalorder %s22, 0
    %p232 = por %p230, %p231
    %p233 = scmp.ne.s32.totalorder %s221, %s222
    %p234 = scmp.eq.s32.totalorder %s23, 1
    %p235 = por %p233, %p234
    %p237 = scmp.ne.s32.totalorder %s222, %s236
    %p238 = scmp.eq.s32.totalorder %s23, 0
    %p239 = por %p237, %p238
    %s241 = sadd.s32 %s240, 1
    %p244 = scmp.eq.s32.totalorder %s17, 1
    %p245 = scmp.ne.s32.totalorder %s240, %s242
    %p246 = scmp.eq.s32.totalorder %s17, 0
    %p247 = por %p245, %p246
    %p248 = scmp.ne.s32.totalorder %s240, %s242
    %p249 = scmp.eq.s32.totalorder %s22, 1
    %p250 = por %p248, %p249
    %p251 = scmp.ne.s32.totalorder %s242, %s243
    %p252 = scmp.eq.s32.totalorder %s22, 0
    %p253 = por %p251, %p252
    %p254 = scmp.ne.s32.totalorder %s242, %s243
    %p255 = scmp.eq.s32.totalorder %s23, 1
    %p256 = por %p254, %p255
    %p258 = scmp.ne.s32.totalorder %s243, %s257
    %p259 = scmp.eq.s32.totalorder %s23, 0
    %p260 = por %p258, %p259
    %s261 = ssub.s32 %s17, %s24
    %p262 = scmp.eq.s32.totalorder %s261, 0
    %s264 = sadd.s32 %s263, 1
    %s265 = scalar_select %p262, %s263, %s264
    %p268 = pneg %p262
    %p269 = scmp.eq.s32.totalorder %s17, 1
    %p270 = por %p268, %p269
    %p271 = scmp.ne.s32.totalorder %s263, %s266
    %p272 = scmp.eq.s32.totalorder %s17, 0
    %p273 = por %p271, %p272
    %p274 = scmp.ne.s32.totalorder %s263, %s266
    %p275 = scmp.eq.s32.totalorder %s22, 1
    %p276 = por %p274, %p275
    %p277 = scmp.ne.s32.totalorder %s266, %s267
    %p278 = scmp.eq.s32.totalorder %s22, 0
    %p279 = por %p277, %p278
    %p280 = scmp.ne.s32.totalorder %s266, %s267
    %p281 = scmp.eq.s32.totalorder %s23, 1
    %p282 = por %p280, %p281
    %p284 = scmp.ne.s32.totalorder %s267, %s283
    %p285 = scmp.eq.s32.totalorder %s23, 0
    %p286 = por %p284, %p285
    %p287 = scmp.le.s32.totalorder 1, %s17
    %p288 = scmp.lt.s32.totalorder %s17, 3
    %p289 = pnand %p287, %p288
    %p290 = pneg %p289
    // Predicated region
    $region9: #{bottleneck_forward.1} parent=5 // pred_check
      _
    $region10: #{bottleneck_forward.1} parent=5 // pred_check_branch
      %292 = sbr.rel (%p289) target = $region12
    $region11: #{bottleneck_forward.1} parent=5 // pred_region
      %s293 = ssub.s32 %s17, 1
      // Predicated region
      $region13: #{bottleneck_forward.1} parent=11 // pred_check
        %p294 = pneg %p64
      $region14: #{bottleneck_forward.1} parent=11 // pred_check_branch
        %296 = sbr.rel (%p294) target = $region16
      $region15: #{bottleneck_forward.1} parent=11 // pred_region
        _
      $region16: #{bottleneck_forward.1} parent=11 // pred_fallthru
        _
      // Predicated region
      $region17: #{bottleneck_forward.1} parent=11 // pred_check
        %p297 = pneg %p85
      $region18: #{bottleneck_forward.1} parent=11 // pred_check_branch
        %299 = sbr.rel (%p297) target = $region20
      $region19: #{bottleneck_forward.1} parent=11 // pred_region
        _
      $region20: #{bottleneck_forward.1} parent=11 // pred_fallthru
        _
      // Predicated region
      $region21: #{bottleneck_forward.1} parent=11 // pred_check
        %p300 = pneg %p106
      $region22: #{bottleneck_forward.1} parent=11 // pred_check_branch
        %302 = sbr.rel (%p300) target = $region24
      $region23: #{bottleneck_forward.1} parent=11 // pred_region
        _
      $region24: #{bottleneck_forward.1} parent=11 // pred_fallthru
        _
      // Predicated region
      $region25: #{bottleneck_forward.1} parent=11 // pred_check
        %p303 = pneg %p127
      $region26: #{bottleneck_forward.1} parent=11 // pred_check_branch
        %305 = sbr.rel (%p303) target = $region28
      $region27: #{bottleneck_forward.1} parent=11 // pred_region
        _
      $region28: #{bottleneck_forward.1} parent=11 // pred_fallthru
        _
      // Predicated region
      $region29: #{bottleneck_forward.1} parent=11 // pred_check
        %p306 = pneg %p148
      $region30: #{bottleneck_forward.1} parent=11 // pred_check_branch
        %308 = sbr.rel (%p306) target = $region32
      $region31: #{bottleneck_forward.1} parent=11 // pred_region
        _
      $region32: #{bottleneck_forward.1} parent=11 // pred_fallthru
        _
      // Predicated region
      $region33: #{bottleneck_forward.1} parent=11 // pred_check
        %p309 = pneg %p169
      $region34: #{bottleneck_forward.1} parent=11 // pred_check_branch
        %311 = sbr.rel (%p309) target = $region36
      $region35: #{bottleneck_forward.1} parent=11 // pred_region
        _
      $region36: #{bottleneck_forward.1} parent=11 // pred_fallthru
        _
      // Predicated region
      $region37: #{bottleneck_forward.1} parent=11 // pred_check
        %p312 = pneg %p190
      $region38: #{bottleneck_forward.1} parent=11 // pred_check_branch
        %314 = sbr.rel (%p312) target = $region40
      $region39: #{bottleneck_forward.1} parent=11 // pred_region
        _
      $region40: #{bottleneck_forward.1} parent=11 // pred_fallthru
        _
      // Predicated region
      $region41: #{bottleneck_forward.1} parent=11 // pred_check
        %p315 = pneg %p211
      $region42: #{bottleneck_forward.1} parent=11 // pred_check_branch
        %317 = sbr.rel (%p315) target = $region44
      $region43: #{bottleneck_forward.1} parent=11 // pred_region
        _
      $region44: #{bottleneck_forward.1} parent=11 // pred_fallthru
        _
      // Predicated region
      $region45: #{bottleneck_forward.1} parent=11 // pred_check
        %p318 = pneg %p232
      $region46: #{bottleneck_forward.1} parent=11 // pred_check_branch
        %320 = sbr.rel (%p318) target = $region48
      $region47: #{bottleneck_forward.1} parent=11 // pred_region
        _
      $region48: #{bottleneck_forward.1} parent=11 // pred_fallthru
        _
      // Predicated region
      $region49: #{bottleneck_forward.1} parent=11 // pred_check
        %p321 = pneg %p253
      $region50: #{bottleneck_forward.1} parent=11 // pred_check_branch
        %323 = sbr.rel (%p321) target = $region52
      $region51: #{bottleneck_forward.1} parent=11 // pred_region
        _
      $region52: #{bottleneck_forward.1} parent=11 // pred_fallthru
        _
    $region12: #{bottleneck_forward.1} parent=5 // pred_fallthru
      _
    %p324 = scmp.lt.s32.totalorder %s17, 2
    // Predicated region
    $region53: #{bottleneck_forward.1} parent=5 // pred_check
      %p325 = pneg %p324
    $region54: #{bottleneck_forward.1} parent=5 // pred_check_branch
      %327 = sbr.rel (%p325) target = $region56
    $region55: #{bottleneck_forward.1} parent=5 // pred_region
      // Predicated region
      $region57: #{bottleneck_forward.1} parent=55 // pred_check
        %p328 = pneg %p37
      $region58: #{bottleneck_forward.1} parent=55 // pred_check_branch
        %330 = sbr.rel (%p328) target = $region60
      $region59: #{bottleneck_forward.1} parent=55 // pred_region
        %p331 = scmp.lt.s32.totalorder %s17, 1
        %s332 = scalar_select %p331, %s17, 1
        %s333 = smul.addr %s332, 2
        %s334 = smul.addr %s333, 2
        %s335 = scalar_lea.vmem %s0, %s334
      $region60: #{bottleneck_forward.1} parent=55 // pred_fallthru
        _
    $region56: #{bottleneck_forward.1} parent=5 // pred_fallthru
      _
    %p336 = scmp.le.s32.totalorder 1, %s17
    %p337 = scmp.lt.s32.totalorder %s17, 3
    %p338 = pnand %p336, %p337
    %p339 = pneg %p338
    // Predicated region
    $region61: #{bottleneck_forward.1} parent=5 // pred_check
      _
    $region62: #{bottleneck_forward.1} parent=5 // pred_check_branch
      %341 = sbr.rel (%p338) target = $region64
    $region63: #{bottleneck_forward.1} parent=5 // pred_region
      %s342 = ssub.s32 %s17, 1
      %p343 = scmp.lt.s32.totalorder %s22, 1
      %s344 = scalar_select %p343, %s22, 1
      %s345 = smul.addr %s344, 2
      %s346 = smul.addr %s345, 2
      %s347 = scalar_lea.vmem %s0, %s346
      %p348 = pneg %p43
      %p349 = pneg %p40
      %p350 = pneg %p64
      %p351 = pneg %p61
      %p352 = pneg %p85
      %p353 = pneg %p82
      %p354 = pneg %p106
      %p355 = pneg %p103
      %p356 = pneg %p127
      %p357 = pneg %p124
      %p358 = pneg %p148
      %p359 = pneg %p145
      %p360 = pneg %p169
      %p361 = pneg %p166
      %p362 = pneg %p190
      %p363 = pneg %p187
      %p364 = pneg %p211
      %p365 = pneg %p208
      %p366 = pneg %p232
      %p367 = pneg %p229
      %p368 = pneg %p253
      %p369 = pneg %p250
      %p370 = pneg %p279
      %p371 = pneg %p276
      %p372 = scmp.lt.s32.totalorder %s22, 1
      %s373 = scalar_select %p372, %s22, 1
      %s374 = smul.addr %s373, 2
      %s375 = smul.addr %s374, 8
      %s376 = scalar_lea.vmem %s11, %s375
      %p377 = scmp.lt.s32.totalorder %s22, 1
      %s378 = scalar_select %p377, %s22, 1
      %s379 = smul.addr %s378, 2
      %s380 = smul.addr %s379, 2
      %s381 = scalar_lea.vmem %s0, %s380
      %p382 = scmp.lt.s32.totalorder %s22, 1
      %s383 = scalar_select %p382, %s22, 1
      %s384 = smul.addr %s383, 2
      %s385 = smul.addr %s384, 8
      %s386 = scalar_lea.vmem %s11, %s385
      %388 = vst [vmem:[#allocation2] sm:$0xff] 0.0
      %389 = vst [vmem:[#allocation2 + $0x8] sm:$0xff] 0.0
      %v390 = vld [vmem:[%s381] sm:$0xf]
      %v391 = vunpack.c.l.bf16 %v390
      %392 = vst [vmem:[#allocation2 + $0x4] sm:$0xff] %v391
      %v393 = vld [vmem:[#allocation2] sm:$0xff]
      %v394 = vld [vmem:[#allocation2 + $0x8] sm:$0xf]
      %s395 = scalar_lea.vmem %s1, 3
      %v396 = vld [vmem:[%s395] ss:$8 sm:$0x3]
      %v398 = vlaneseq
      %v399 = vshrl.u32 %v398, 7
      %v400 = vsub.s32 0, %v399
      %v401 = vrot.slane %v396, %v400
      %v402 = vlaneseq
      %v403 = vshrl.u32 %v402, 7
      %v404 = vsub.s32 1, %v403
      %v405 = vrot.slane %v396, %v404
      %v406 = vcombine.low %v401, %v405
      %407 = vrot.lane.b32.xlu0 %v406, 111
      %v408 = vpop.permute.xlu0 %407
      %v409 = vrot.slane %v408, 4
      %vm410 = vcmask 908288
      %v411 = vsel %vm410, %v409, %v408
      %v414 = vmul.f32 %v393, %v411
      %v415 = vmul.f32 %v394, %v409
      %v417 = vcombine.high %v414, %v414
      %v419 = vpack.c.bf16 %v414, %v414
      %v420 = vpack.c.bf16 %v417, %v417
      %v421 = vpack.c.bf16 %v415, %v415
      %v422 = vld [vmem:[%s2] sm:$0xf]
      %v424 = vcombine.high %v393, %v393
      %v426 = vpack.c.bf16 %v393, %v393
      %v427 = vpack.c.bf16 %v424, %v424
      %v428 = vpack.c.bf16 %v394, %v394
      %s429 = scalar_lea.vmem %s2, 4
      %v430 = vld [vmem:[%s429] sm:$0xf]
      %434 = vrot.lane.b32.xlu0 %v426, 16
      %v435 = vpop.permute.xlu0 %434
      %436 = vrot.lane.b32.xlu0 %v427, 16
      %v437 = vpop.permute.xlu0 %436
      %438 = vrot.lane.b32.xlu0 %v428, 16
      %v439 = vpop.permute.xlu0 %438
      %vm440 = vcmask 130048
      %v441 = vsel %vm440, %v435, %v437
      %v442 = vsel %vm440, %v437, %v439
      %vm443 = vcmask 31744
      %v445 = vsel %vm443, %v430, 0
      %vm447 = vcmask 1041408
      %v449 = vsel %vm447, %v441, 0
      %v452 = vsel %vm447, %v442, 0
      %454 = vmatprep.subr.bf16.mxu0 0
      %455 = vmatpush1.bf16.msra.mxu0 0
      %456 = vmatprep.subr.bf16.mxu0 0
      %457 = vmatpush1.bf16.msra.mxu0 0
      %458 = vmatprep.subr.bf16.mxu0 0
      %459 = vmatpush1.bf16.msra.mxu0 0
      %460 = vmatprep.subr.bf16.mxu0 0
      %461 = vmatpush1.bf16.msra.mxu0 0
      %462 = vmatprep.subr.bf16.mxu0 0
      %463 = vmatpush1.bf16.msra.mxu0 0
      %464 = vmatprep.subr.bf16.mxu0 0
      %465 = vmatpush1.bf16.msra.mxu0 0
      %466 = vmatprep.subr.bf16.mxu0 0
      %467 = vmatpush1.bf16.msra.mxu0 0
      %468 = vmatprep.subr.bf16.mxu0 %v452
      %469 = vmatpush1.bf16.msra.mxu0 %v449
      %470 = vmatprep.subr.bf16.mxu0 0
      %471 = vmatpush2.bf16.msra.mxu0 0
      %472 = vmatprep.subr.bf16.mxu0 0
      %473 = vmatpush2.bf16.msra.mxu0 0
      %474 = vmatprep.subr.bf16.mxu0 0
      %475 = vmatpush2.bf16.msra.mxu0 0
      %476 = vmatprep.subr.bf16.mxu0 0
      %477 = vmatpush2.bf16.msra.mxu0 0
      %478 = vmatprep.subr.bf16.mxu0 0
      %479 = vmatpush2.bf16.msra.mxu0 0
      %480 = vmatprep.subr.bf16.mxu0 0
      %481 = vmatpush2.bf16.msra.mxu0 0
      %482 = vmatprep.subr.bf16.mxu0 0
      %483 = vmatpush2.bf16.msra.mxu0 0
      %484 = vmatprep.subr.bf16.mxu0 0
      %485 = vmatpush2.bf16.msra.mxu0 0
      %486 = vmatprep.mubr.bf16.mxu0 0
      %487 = vmatmul.mubr.bf16.gmra.mxu0 %v445
      %v488 = vpop.f32.mrf.mxu0
      %v489 = vadd.f32 0.0, %v488
      %v490 = vpop.f32.mrf.mxu0
      %v491 = vadd.f32 0.0, %v490
      %v492 = vpop.f32.mrf.mxu0
      %v493 = vpop.f32.mrf.mxu0
      %494 = vdwg.mxu0
      %498 = vrot.lane.b32.xlu0 %v419, 17
      %v499 = vpop.permute.xlu0 %498
      %500 = vrot.lane.b32.xlu0 %v420, 17
      %v501 = vpop.permute.xlu0 %500
      %502 = vrot.lane.b32.xlu0 %v421, 17
      %v503 = vpop.permute.xlu0 %502
      %vm504 = vcmask 138240
      %v505 = vsel %vm504, %v499, %v501
      %v506 = vsel %vm504, %v501, %v503
      %v508 = vsel %vm443, %v422, 0
      %v511 = vsel %vm447, %v505, 0
      %v514 = vsel %vm447, %v506, 0
      %516 = vmatprep.subr.bf16.mxu0 0
      %517 = vmatpush1.bf16.msra.mxu0 0
      %518 = vmatprep.subr.bf16.mxu0 0
      %519 = vmatpush1.bf16.msra.mxu0 0
      %520 = vmatprep.subr.bf16.mxu0 0
      %521 = vmatpush1.bf16.msra.mxu0 0
      %522 = vmatprep.subr.bf16.mxu0 0
      %523 = vmatpush1.bf16.msra.mxu0 0
      %524 = vmatprep.subr.bf16.mxu0 0
      %525 = vmatpush1.bf16.msra.mxu0 0
      %526 = vmatprep.subr.bf16.mxu0 0
      %527 = vmatpush1.bf16.msra.mxu0 0
      %528 = vmatprep.subr.bf16.mxu0 0
      %529 = vmatpush1.bf16.msra.mxu0 0
      %530 = vmatprep.subr.bf16.mxu0 %v514
      %531 = vmatpush1.bf16.msra.mxu0 %v511
      %532 = vmatprep.subr.bf16.mxu0 0
      %533 = vmatpush2.bf16.msra.mxu0 0
      %534 = vmatprep.subr.bf16.mxu0 0
      %535 = vmatpush2.bf16.msra.mxu0 0
      %536 = vmatprep.subr.bf16.mxu0 0
      %537 = vmatpush2.bf16.msra.mxu0 0
      %538 = vmatprep.subr.bf16.mxu0 0
      %539 = vmatpush2.bf16.msra.mxu0 0
      %540 = vmatprep.subr.bf16.mxu0 0
      %541 = vmatpush2.bf16.msra.mxu0 0
      %542 = vmatprep.subr.bf16.mxu0 0
      %543 = vmatpush2.bf16.msra.mxu0 0
      %544 = vmatprep.subr.bf16.mxu0 0
      %545 = vmatpush2.bf16.msra.mxu0 0
      %546 = vmatprep.subr.bf16.mxu0 0
      %547 = vmatpush2.bf16.msra.mxu0 0
      %548 = vmatprep.mubr.bf16.mxu0 0
      %549 = vmatmul.mubr.bf16.gmra.mxu0 %v508
      %v550 = vpop.f32.mrf.mxu0
      %v551 = vadd.f32 %v489, %v550
      %v552 = vpop.f32.mrf.mxu0
      %v553 = vadd.f32 %v491, %v552
      %v554 = vpop.f32.mrf.mxu0
      %v555 = vpop.f32.mrf.mxu0
      %556 = vdwg.mxu0
      %v557 = vld [vmem:[#allocation2] sm:$0xff]
      %v558 = vld [vmem:[#allocation2 + $0x8] sm:$0xf]
      %s559 = scalar_lea.vmem %s1, 4
      %v560 = vld [vmem:[%s559] ss:$8 sm:$0x3]
      %v562 = vlaneseq
      %v563 = vshrl.u32 %v562, 7
      %v564 = vsub.s32 0, %v563
      %v565 = vrot.slane %v560, %v564
      %v566 = vlaneseq
      %v567 = vshrl.u32 %v566, 7
      %v568 = vsub.s32 1, %v567
      %v569 = vrot.slane %v560, %v568
      %v570 = vcombine.low %v565, %v569
      %571 = vrot.lane.b32.xlu0 %v570, 113
      %v572 = vpop.permute.xlu0 %571
      %v573 = vrot.slane %v572, 4
      %vm574 = vcmask 924672
      %v575 = vsel %vm574, %v573, %v572
      %v578 = vmul.f32 %v557, %v575
      %v579 = vmul.f32 %v558, %v573
      %v581 = vcombine.high %v578, %v578
      %v583 = vpack.c.bf16 %v578, %v578
      %v584 = vpack.c.bf16 %v581, %v581
      %v585 = vpack.c.bf16 %v579, %v579
      %s586 = scalar_lea.vmem %s2, 8
      %v587 = vld [vmem:[%s586] sm:$0xf]
      %591 = vrot.lane.b32.xlu0 %v583, 15
      %v592 = vpop.permute.xlu0 %591
      %593 = vrot.lane.b32.xlu0 %v584, 15
      %v594 = vpop.permute.xlu0 %593
      %595 = vrot.lane.b32.xlu0 %v585, 15
      %v596 = vpop.permute.xlu0 %595
      %vm597 = vcmask 121856
      %v598 = vsel %vm597, %v592, %v594
      %v599 = vsel %vm597, %v594, %v596
      %v601 = vsel %vm443, %v587, 0
      %v604 = vsel %vm447, %v598, 0
      %v607 = vsel %vm447, %v599, 0
      %609 = vmatprep.subr.bf16.mxu0 0
      %610 = vmatpush1.bf16.msra.mxu0 0
      %611 = vmatprep.subr.bf16.mxu0 0
      %612 = vmatpush1.bf16.msra.mxu0 0
      %613 = vmatprep.subr.bf16.mxu0 0
      %614 = vmatpush1.bf16.msra.mxu0 0
      %615 = vmatprep.subr.bf16.mxu0 0
      %616 = vmatpush1.bf16.msra.mxu0 0
      %617 = vmatprep.subr.bf16.mxu0 0
      %618 = vmatpush1.bf16.msra.mxu0 0
      %619 = vmatprep.subr.bf16.mxu0 0
      %620 = vmatpush1.bf16.msra.mxu0 0
      %621 = vmatprep.subr.bf16.mxu0 0
      %622 = vmatpush1.bf16.msra.mxu0 0
      %623 = vmatprep.subr.bf16.mxu0 %v607
      %624 = vmatpush1.bf16.msra.mxu0 %v604
      %625 = vmatprep.subr.bf16.mxu0 0
      %626 = vmatpush2.bf16.msra.mxu0 0
      %627 = vmatprep.subr.bf16.mxu0 0
      %628 = vmatpush2.bf16.msra.mxu0 0
      %629 = vmatprep.subr.bf16.mxu0 0
      %630 = vmatpush2.bf16.msra.mxu0 0
      %631 = vmatprep.subr.bf16.mxu0 0
      %632 = vmatpush2.bf16.msra.mxu0 0
      %633 = vmatprep.subr.bf16.mxu0 0
      %634 = vmatpush2.bf16.msra.mxu0 0
      %635 = vmatprep.subr.bf16.mxu0 0
      %636 = vmatpush2.bf16.msra.mxu0 0
      %637 = vmatprep.subr.bf16.mxu0 0
      %638 = vmatpush2.bf16.msra.mxu0 0
      %639 = vmatprep.subr.bf16.mxu0 0
      %640 = vmatpush2.bf16.msra.mxu0 0
      %641 = vmatprep.mubr.bf16.mxu0 0
      %642 = vmatmul.mubr.bf16.gmra.mxu0 %v601
      %v643 = vpop.f32.mrf.mxu0
      %v644 = vadd.f32 0.0, %v643
      %v645 = vpop.f32.mrf.mxu0
      %v646 = vadd.f32 0.0, %v645
      %v647 = vpop.f32.mrf.mxu0
      %v648 = vpop.f32.mrf.mxu0
      %649 = vdwg.mxu0
      %v650 = vadd.f32 %v551, %v644
      %v651 = vadd.f32 %v553, %v646
      %v652 = vld [vmem:[#allocation2] sm:$0xff]
      %v653 = vld [vmem:[#allocation2 + $0x8] sm:$0xf]
      %654 = vrot.lane.b32.xlu0 %v406, 127
      %v655 = vpop.permute.xlu0 %654
      %v656 = vrot.slane %v655, 4
      %vm657 = vcmask 1039360
      %v658 = vsel %vm657, %v656, %v655
      %v661 = vmul.f32 %v652, %v658
      %v662 = vmul.f32 %v653, %v656
      %v664 = vcombine.high %v661, %v661
      %v666 = vpack.c.bf16 %v661, %v661
      %v667 = vpack.c.bf16 %v664, %v664
      %v668 = vpack.c.bf16 %v662, %v662
      %s669 = scalar_lea.vmem %s2, 12
      %v670 = vld [vmem:[%s669] sm:$0xf]
      %674 = vrot.lane.b32.xlu0 %v666, 1
      %v675 = vpop.permute.xlu0 %674
      %676 = vrot.lane.b32.xlu0 %v667, 1
      %v677 = vpop.permute.xlu0 %676
      %678 = vrot.lane.b32.xlu0 %v668, 1
      %v679 = vpop.permute.xlu0 %678
      %vm680 = vcmask 7168
      %v681 = vsel %vm680, %v675, %v677
      %v682 = vsel %vm680, %v677, %v679
      %v684 = vsel %vm443, %v670, 0
      %v687 = vsel %vm447, %v681, 0
      %v690 = vsel %vm447, %v682, 0
      %692 = vmatprep.subr.bf16.mxu0 0
      %693 = vmatpush1.bf16.msra.mxu0 0
      %694 = vmatprep.subr.bf16.mxu0 0
      %695 = vmatpush1.bf16.msra.mxu0 0
      %696 = vmatprep.subr.bf16.mxu0 0
      %697 = vmatpush1.bf16.msra.mxu0 0
      %698 = vmatprep.subr.bf16.mxu0 0
      %699 = vmatpush1.bf16.msra.mxu0 0
      %700 = vmatprep.subr.bf16.mxu0 0
      %701 = vmatpush1.bf16.msra.mxu0 0
      %702 = vmatprep.subr.bf16.mxu0 0
      %703 = vmatpush1.bf16.msra.mxu0 0
      %704 = vmatprep.subr.bf16.mxu0 0
      %705 = vmatpush1.bf16.msra.mxu0 0
      %706 = vmatprep.subr.bf16.mxu0 %v690
      %707 = vmatpush1.bf16.msra.mxu0 %v687
      %708 = vmatprep.subr.bf16.mxu0 0
      %709 = vmatpush2.bf16.msra.mxu0 0
      %710 = vmatprep.subr.bf16.mxu0 0
      %711 = vmatpush2.bf16.msra.mxu0 0
      %712 = vmatprep.subr.bf16.mxu0 0
      %713 = vmatpush2.bf16.msra.mxu0 0
      %714 = vmatprep.subr.bf16.mxu0 0
      %715 = vmatpush2.bf16.msra.mxu0 0
      %716 = vmatprep.subr.bf16.mxu0 0
      %717 = vmatpush2.bf16.msra.mxu0 0
      %718 = vmatprep.subr.bf16.mxu0 0
      %719 = vmatpush2.bf16.msra.mxu0 0
      %720 = vmatprep.subr.bf16.mxu0 0
      %721 = vmatpush2.bf16.msra.mxu0 0
      %722 = vmatprep.subr.bf16.mxu0 0
      %723 = vmatpush2.bf16.msra.mxu0 0
      %724 = vmatprep.mubr.bf16.mxu0 0
      %725 = vmatmul.mubr.bf16.gmra.mxu0 %v684
      %v726 = vpop.f32.mrf.mxu0
      %v727 = vadd.f32 0.0, %v726
      %v728 = vpop.f32.mrf.mxu0
      %v729 = vadd.f32 0.0, %v728
      %v730 = vpop.f32.mrf.mxu0
      %v731 = vpop.f32.mrf.mxu0
      %732 = vdwg.mxu0
      %v733 = vadd.f32 %v650, %v727
      %v734 = vadd.f32 %v651, %v729
      %v735 = vld [vmem:[#allocation2 + $0x4] sm:$0xff]
      %v737 = vcombine.high %v735, %v735
      %v739 = vpack.c.bf16 %v735, %v735
      %v740 = vpack.c.bf16 %v737, %v737
      %s741 = scalar_lea.vmem %s2, 16
      %v742 = vld [vmem:[%s741] sm:$0xf]
      %v744 = vsel %vm443, %v742, 0
      %v747 = vsel %vm447, %v739, 0
      %v750 = vsel %vm447, %v740, 0
      %752 = vmatprep.subr.bf16.mxu0 0
      %753 = vmatpush1.bf16.msra.mxu0 0
      %754 = vmatprep.subr.bf16.mxu0 0
      %755 = vmatpush1.bf16.msra.mxu0 0
      %756 = vmatprep.subr.bf16.mxu0 0
      %757 = vmatpush1.bf16.msra.mxu0 0
      %758 = vmatprep.subr.bf16.mxu0 0
      %759 = vmatpush1.bf16.msra.mxu0 0
      %760 = vmatprep.subr.bf16.mxu0 0
      %761 = vmatpush1.bf16.msra.mxu0 0
      %762 = vmatprep.subr.bf16.mxu0 0
      %763 = vmatpush1.bf16.msra.mxu0 0
      %764 = vmatprep.subr.bf16.mxu0 0
      %765 = vmatpush1.bf16.msra.mxu0 0
      %766 = vmatprep.subr.bf16.mxu0 %v750
      %767 = vmatpush1.bf16.msra.mxu0 %v747
      %768 = vmatprep.subr.bf16.mxu0 0
      %769 = vmatpush2.bf16.msra.mxu0 0
      %770 = vmatprep.subr.bf16.mxu0 0
      %771 = vmatpush2.bf16.msra.mxu0 0
      %772 = vmatprep.subr.bf16.mxu0 0
      %773 = vmatpush2.bf16.msra.mxu0 0
      %774 = vmatprep.subr.bf16.mxu0 0
      %775 = vmatpush2.bf16.msra.mxu0 0
      %776 = vmatprep.subr.bf16.mxu0 0
      %777 = vmatpush2.bf16.msra.mxu0 0
      %778 = vmatprep.subr.bf16.mxu0 0
      %779 = vmatpush2.bf16.msra.mxu0 0
      %780 = vmatprep.subr.bf16.mxu0 0
      %781 = vmatpush2.bf16.msra.mxu0 0
      %782 = vmatprep.subr.bf16.mxu0 0
      %783 = vmatpush2.bf16.msra.mxu0 0
      %784 = vmatprep.mubr.bf16.mxu0 0
      %785 = vmatmul.mubr.bf16.gmra.mxu0 %v744
      %v786 = vpop.f32.mrf.mxu0
      %v787 = vadd.f32 0.0, %v786
      %v788 = vpop.f32.mrf.mxu0
      %v789 = vadd.f32 0.0, %v788
      %v790 = vpop.f32.mrf.mxu0
      %v791 = vpop.f32.mrf.mxu0
      %792 = vdwg.mxu0
      %v793 = vadd.f32 %v733, %v787
      %v794 = vadd.f32 %v734, %v789
      %v795 = vld [vmem:[#allocation2 + $0x4] sm:$0xff]
      %v796 = vld [vmem:[#allocation2 + $0xc] sm:$0xf]
      %797 = vrot.lane.b32.xlu0 %v570, 1
      %v798 = vpop.permute.xlu0 %797
      %v799 = vrot.slane %v798, 4
      %vm800 = vcmask 7168
      %v801 = vsel %vm800, %v799, %v798
      %v804 = vmul.f32 %v795, %v801
      %v805 = vmul.f32 %v796, %v799
      %v807 = vcombine.high %v804, %v804
      %v809 = vpack.c.bf16 %v804, %v804
      %v810 = vpack.c.bf16 %v807, %v807
      %v811 = vpack.c.bf16 %v805, %v805
      %s812 = scalar_lea.vmem %s2, 20
      %v813 = vld [vmem:[%s812] sm:$0xf]
      %817 = vrot.lane.b32.xlu0 %v809, 127
      %v818 = vpop.permute.xlu0 %817
      %819 = vrot.lane.b32.xlu0 %v810, 127
      %v820 = vpop.permute.xlu0 %819
      %821 = vrot.lane.b32.xlu0 %v811, 127
      %v822 = vpop.permute.xlu0 %821
      %vm823 = vcmask 1039360
      %v824 = vsel %vm823, %v818, %v820
      %v825 = vsel %vm823, %v820, %v822
      %v827 = vsel %vm443, %v813, 0
      %v830 = vsel %vm447, %v824, 0
      %v833 = vsel %vm447, %v825, 0
      %835 = vmatprep.subr.bf16.mxu0 0
      %836 = vmatpush1.bf16.msra.mxu0 0
      %837 = vmatprep.subr.bf16.mxu0 0
      %838 = vmatpush1.bf16.msra.mxu0 0
      %839 = vmatprep.subr.bf16.mxu0 0
      %840 = vmatpush1.bf16.msra.mxu0 0
      %841 = vmatprep.subr.bf16.mxu0 0
      %842 = vmatpush1.bf16.msra.mxu0 0
      %843 = vmatprep.subr.bf16.mxu0 0
      %844 = vmatpush1.bf16.msra.mxu0 0
      %845 = vmatprep.subr.bf16.mxu0 0
      %846 = vmatpush1.bf16.msra.mxu0 0
      %847 = vmatprep.subr.bf16.mxu0 0
      %848 = vmatpush1.bf16.msra.mxu0 0
      %849 = vmatprep.subr.bf16.mxu0 %v833
      %850 = vmatpush1.bf16.msra.mxu0 %v830
      %851 = vmatprep.subr.bf16.mxu0 0
      %852 = vmatpush2.bf16.msra.mxu0 0
      %853 = vmatprep.subr.bf16.mxu0 0
      %854 = vmatpush2.bf16.msra.mxu0 0
      %855 = vmatprep.subr.bf16.mxu0 0
      %856 = vmatpush2.bf16.msra.mxu0 0
      %857 = vmatprep.subr.bf16.mxu0 0
      %858 = vmatpush2.bf16.msra.mxu0 0
      %859 = vmatprep.subr.bf16.mxu0 0
      %860 = vmatpush2.bf16.msra.mxu0 0
      %861 = vmatprep.subr.bf16.mxu0 0
      %862 = vmatpush2.bf16.msra.mxu0 0
      %863 = vmatprep.subr.bf16.mxu0 0
      %864 = vmatpush2.bf16.msra.mxu0 0
      %865 = vmatprep.subr.bf16.mxu0 0
      %866 = vmatpush2.bf16.msra.mxu0 0
      %867 = vmatprep.mubr.bf16.mxu0 0
      %868 = vmatmul.mubr.bf16.gmra.mxu0 %v827
      %v869 = vpop.f32.mrf.mxu0
      %v870 = vadd.f32 0.0, %v869
      %v871 = vpop.f32.mrf.mxu0
      %v872 = vadd.f32 0.0, %v871
      %v873 = vpop.f32.mrf.mxu0
      %v874 = vpop.f32.mrf.mxu0
      %875 = vdwg.mxu0
      %v876 = vadd.f32 %v793, %v870
      %v877 = vadd.f32 %v794, %v872
      %v878 = vld [vmem:[#allocation2 + $0x4] sm:$0xff]
      %v879 = vld [vmem:[#allocation2 + $0xc] sm:$0xf]
      %880 = vrot.lane.b32.xlu0 %v406, 15
      %v881 = vpop.permute.xlu0 %880
      %v882 = vrot.slane %v881, 4
      %vm883 = vcmask 121856
      %v884 = vsel %vm883, %v882, %v881
      %v887 = vmul.f32 %v878, %v884
      %v888 = vmul.f32 %v879, %v882
      %v890 = vcombine.high %v887, %v887
      %v892 = vpack.c.bf16 %v887, %v887
      %v893 = vpack.c.bf16 %v890, %v890
      %v894 = vpack.c.bf16 %v888, %v888
      %s895 = scalar_lea.vmem %s2, 24
      %v896 = vld [vmem:[%s895] sm:$0xf]
      %900 = vrot.lane.b32.xlu0 %v892, 113
      %v901 = vpop.permute.xlu0 %900
      %902 = vrot.lane.b32.xlu0 %v893, 113
      %v903 = vpop.permute.xlu0 %902
      %904 = vrot.lane.b32.xlu0 %v894, 113
      %v905 = vpop.permute.xlu0 %904
      %vm906 = vcmask 924672
      %v907 = vsel %vm906, %v901, %v903
      %v908 = vsel %vm906, %v903, %v905
      %v910 = vsel %vm443, %v896, 0
      %v913 = vsel %vm447, %v907, 0
      %v916 = vsel %vm447, %v908, 0
      %918 = vmatprep.subr.bf16.mxu0 0
      %919 = vmatpush1.bf16.msra.mxu0 0
      %920 = vmatprep.subr.bf16.mxu0 0
      %921 = vmatpush1.bf16.msra.mxu0 0
      %922 = vmatprep.subr.bf16.mxu0 0
      %923 = vmatpush1.bf16.msra.mxu0 0
      %924 = vmatprep.subr.bf16.mxu0 0
      %925 = vmatpush1.bf16.msra.mxu0 0
      %926 = vmatprep.subr.bf16.mxu0 0
      %927 = vmatpush1.bf16.msra.mxu0 0
      %928 = vmatprep.subr.bf16.mxu0 0
      %929 = vmatpush1.bf16.msra.mxu0 0
      %930 = vmatprep.subr.bf16.mxu0 0
      %931 = vmatpush1.bf16.msra.mxu0 0
      %932 = vmatprep.subr.bf16.mxu0 %v916
      %933 = vmatpush1.bf16.msra.mxu0 %v913
      %934 = vmatprep.subr.bf16.mxu0 0
      %935 = vmatpush2.bf16.msra.mxu0 0
      %936 = vmatprep.subr.bf16.mxu0 0
      %937 = vmatpush2.bf16.msra.mxu0 0
      %938 = vmatprep.subr.bf16.mxu0 0
      %939 = vmatpush2.bf16.msra.mxu0 0
      %940 = vmatprep.subr.bf16.mxu0 0
      %941 = vmatpush2.bf16.msra.mxu0 0
      %942 = vmatprep.subr.bf16.mxu0 0
      %943 = vmatpush2.bf16.msra.mxu0 0
      %944 = vmatprep.subr.bf16.mxu0 0
      %945 = vmatpush2.bf16.msra.mxu0 0
      %946 = vmatprep.subr.bf16.mxu0 0
      %947 = vmatpush2.bf16.msra.mxu0 0
      %948 = vmatprep.subr.bf16.mxu0 0
      %949 = vmatpush2.bf16.msra.mxu0 0
      %950 = vmatprep.mubr.bf16.mxu0 0
      %951 = vmatmul.mubr.bf16.gmra.mxu0 %v910
      %v952 = vpop.f32.mrf.mxu0
      %v953 = vadd.f32 0.0, %v952
      %v954 = vpop.f32.mrf.mxu0
      %v955 = vadd.f32 0.0, %v954
      %v956 = vpop.f32.mrf.mxu0
      %v957 = vpop.f32.mrf.mxu0
      %958 = vdwg.mxu0
      %v959 = vadd.f32 %v876, %v953
      %v960 = vadd.f32 %v877, %v955
      %v961 = vld [vmem:[#allocation2 + $0x4] sm:$0xff]
      %v962 = vld [vmem:[#allocation2 + $0xc] sm:$0xf]
      %v964 = vcombine.high %v961, %v961
      %v966 = vpack.c.bf16 %v961, %v961
      %v967 = vpack.c.bf16 %v964, %v964
      %v968 = vpack.c.bf16 %v962, %v962
      %s969 = scalar_lea.vmem %s2, 28
      %v970 = vld [vmem:[%s969] sm:$0xf]
      %974 = vrot.lane.b32.xlu0 %v966, 112
      %v975 = vpop.permute.xlu0 %974
      %976 = vrot.lane.b32.xlu0 %v967, 112
      %v977 = vpop.permute.xlu0 %976
      %978 = vrot.lane.b32.xlu0 %v968, 112
      %v979 = vpop.permute.xlu0 %978
      %vm980 = vcmask 916480
      %v981 = vsel %vm980, %v975, %v977
      %v982 = vsel %vm980, %v977, %v979
      %v984 = vsel %vm443, %v970, 0
      %v987 = vsel %vm447, %v981, 0
      %v990 = vsel %vm447, %v982, 0
      %992 = vmatprep.subr.bf16.mxu0 0
      %993 = vmatpush1.bf16.msra.mxu0 0
      %994 = vmatprep.subr.bf16.mxu0 0
      %995 = vmatpush1.bf16.msra.mxu0 0
      %996 = vmatprep.subr.bf16.mxu0 0
      %997 = vmatpush1.bf16.msra.mxu0 0
      %998 = vmatprep.subr.bf16.mxu0 0
      %999 = vmatpush1.bf16.msra.mxu0 0
      %1000 = vmatprep.subr.bf16.mxu0 0
      %1001 = vmatpush1.bf16.msra.mxu0 0
      %1002 = vmatprep.subr.bf16.mxu0 0
      %1003 = vmatpush1.bf16.msra.mxu0 0
      %1004 = vmatprep.subr.bf16.mxu0 0
      %1005 = vmatpush1.bf16.msra.mxu0 0
      %1006 = vmatprep.subr.bf16.mxu0 %v990
      %1007 = vmatpush1.bf16.msra.mxu0 %v987
      %1008 = vmatprep.subr.bf16.mxu0 0
      %1009 = vmatpush2.bf16.msra.mxu0 0
      %1010 = vmatprep.subr.bf16.mxu0 0
      %1011 = vmatpush2.bf16.msra.mxu0 0
      %1012 = vmatprep.subr.bf16.mxu0 0
      %1013 = vmatpush2.bf16.msra.mxu0 0
      %1014 = vmatprep.subr.bf16.mxu0 0
      %1015 = vmatpush2.bf16.msra.mxu0 0
      %1016 = vmatprep.subr.bf16.mxu0 0
      %1017 = vmatpush2.bf16.msra.mxu0 0
      %1018 = vmatprep.subr.bf16.mxu0 0
      %1019 = vmatpush2.bf16.msra.mxu0 0
      %1020 = vmatprep.subr.bf16.mxu0 0
      %1021 = vmatpush2.bf16.msra.mxu0 0
      %1022 = vmatprep.subr.bf16.mxu0 0
      %1023 = vmatpush2.bf16.msra.mxu0 0
      %1024 = vmatprep.mubr.bf16.mxu0 0
      %1025 = vmatmul.mubr.bf16.gmra.mxu0 %v984
      %v1026 = vpop.f32.mrf.mxu0
      %v1027 = vadd.f32 0.0, %v1026
      %v1028 = vpop.f32.mrf.mxu0
      %v1029 = vadd.f32 0.0, %v1028
      %v1030 = vpop.f32.mrf.mxu0
      %v1031 = vpop.f32.mrf.mxu0
      %1032 = vdwg.mxu0
      %v1033 = vadd.f32 %v959, %v1027
      %v1034 = vadd.f32 %v960, %v1029
      %v1035 = vld [vmem:[#allocation2 + $0x4] sm:$0xff]
      %v1036 = vld [vmem:[#allocation2 + $0xc] sm:$0xf]
      %1037 = vrot.lane.b32.xlu0 %v570, 17
      %v1038 = vpop.permute.xlu0 %1037
      %v1039 = vrot.slane %v1038, 4
      %vm1040 = vcmask 138240
      %v1041 = vsel %vm1040, %v1039, %v1038
      %v1044 = vmul.f32 %v1035, %v1041
      %v1045 = vmul.f32 %v1036, %v1039
      %v1047 = vcombine.high %v1044, %v1044
      %v1049 = vpack.c.bf16 %v1044, %v1044
      %v1050 = vpack.c.bf16 %v1047, %v1047
      %v1051 = vpack.c.bf16 %v1045, %v1045
      %s1052 = scalar_lea.vmem %s2, 32
      %v1053 = vld [vmem:[%s1052] sm:$0xf]
      %1057 = vrot.lane.b32.xlu0 %v1049, 111
      %v1058 = vpop.permute.xlu0 %1057
      %1059 = vrot.lane.b32.xlu0 %v1050, 111
      %v1060 = vpop.permute.xlu0 %1059
      %1061 = vrot.lane.b32.xlu0 %v1051, 111
      %v1062 = vpop.permute.xlu0 %1061
      %vm1063 = vcmask 908288
      %v1064 = vsel %vm1063, %v1058, %v1060
      %v1065 = vsel %vm1063, %v1060, %v1062
      %v1067 = vsel %vm443, %v1053, 0
      %v1070 = vsel %vm447, %v1064, 0
      %v1073 = vsel %vm447, %v1065, 0
      %1075 = vmatprep.subr.bf16.mxu0 0
      %1076 = vmatpush1.bf16.msra.mxu0 0
      %1077 = vmatprep.subr.bf16.mxu0 0
      %1078 = vmatpush1.bf16.msra.mxu0 0
      %1079 = vmatprep.subr.bf16.mxu0 0
      %1080 = vmatpush1.bf16.msra.mxu0 0
      %1081 = vmatprep.subr.bf16.mxu0 0
      %1082 = vmatpush1.bf16.msra.mxu0 0
      %1083 = vmatprep.subr.bf16.mxu0 0
      %1084 = vmatpush1.bf16.msra.mxu0 0
      %1085 = vmatprep.subr.bf16.mxu0 0
      %1086 = vmatpush1.bf16.msra.mxu0 0
      %1087 = vmatprep.subr.bf16.mxu0 0
      %1088 = vmatpush1.bf16.msra.mxu0 0
      %1089 = vmatprep.subr.bf16.mxu0 %v1073
      %1090 = vmatpush1.bf16.msra.mxu0 %v1070
      %1091 = vmatprep.subr.bf16.mxu0 0
      %1092 = vmatpush2.bf16.msra.mxu0 0
      %1093 = vmatprep.subr.bf16.mxu0 0
      %1094 = vmatpush2.bf16.msra.mxu0 0
      %1095 = vmatprep.subr.bf16.mxu0 0
      %1096 = vmatpush2.bf16.msra.mxu0 0
      %1097 = vmatprep.subr.bf16.mxu0 0
      %1098 = vmatpush2.bf16.msra.mxu0 0
      %1099 = vmatprep.subr.bf16.mxu0 0
      %1100 = vmatpush2.bf16.msra.mxu0 0
      %1101 = vmatprep.subr.bf16.mxu0 0
      %1102 = vmatpush2.bf16.msra.mxu0 0
      %1103 = vmatprep.subr.bf16.mxu0 0
      %1104 = vmatpush2.bf16.msra.mxu0 0
      %1105 = vmatprep.subr.bf16.mxu0 0
      %1106 = vmatpush2.bf16.msra.mxu0 0
      %1107 = vmatprep.mubr.bf16.mxu0 0
      %1108 = vmatmul.mubr.bf16.gmra.mxu0 %v1067
      %v1109 = vpop.f32.mrf.mxu0
      %v1110 = vadd.f32 0.0, %v1109
      %v1111 = vpop.f32.mrf.mxu0
      %v1112 = vadd.f32 0.0, %v1111
      %v1113 = vpop.f32.mrf.mxu0
      %v1114 = vpop.f32.mrf.mxu0
      %1115 = vdwg.mxu0
      %v1116 = vadd.f32 %v1033, %v1110
      %v1117 = vadd.f32 %v1034, %v1112
      %v1118 = vld [vmem:[%s3] sm:$0xff]
      %1120 = vset.pattern.permute.xlu0 0
      %1121 = vperm.xlu0 %1120, %v1118
      %v1122 = vpop.permute.xlu0 %1121
      %v1124 = vmul.f32 %v1116, %v1122
      %v1125 = vmul.f32 %v1117, %v1122
      %v1126 = vld [vmem:[%s4] sm:$0xff]
      %1128 = vset.pattern.permute.xlu0 0
      %1129 = vperm.xlu0 %1128, %v1126
      %v1130 = vpop.permute.xlu0 %1129
      %v1132 = vadd.f32 %v1124, %v1130
      %v1133 = vadd.f32 %v1125, %v1130
      %v1134 = vmax.f32 %v1132, 0.0
      %v1135 = vmax.f32 %v1133, 0.0
      %v1136 = vpack.c.bf16 %v1134, %v1134
      %v1137 = vpack.c.bf16 %v1135, %v1135
      %v1138 = vunpack.c.l.bf16 %v1136
      %v1139 = vunpack.c.l.bf16 %v1137
      %1140 = vst [vmem:[#allocation3] sm:$0xff] 0.0
      %1141 = vst [vmem:[#allocation3 + $0x8] sm:$0xff] 0.0
      %1142 = vst [vmem:[#allocation3 + $0x10] sm:$0xff] 0.0
      %1143 = vst [vmem:[#allocation3 + $0x18] sm:$0xff] 0.0
      %1144 = vst [vmem:[#allocation3 + $0x20] sm:$0xff] 0.0
      %1145 = vst [vmem:[#allocation3 + $0x28] sm:$0xff] 0.0
      %1146 = vst [vmem:[#allocation3 + $0x30] sm:$0xff] 0.0
      %1147 = vst [vmem:[#allocation3 + $0x38] sm:$0xff] 0.0
      %1148 = vst [vmem:[#allocation3 + $0x18] sm:$0xff] %v1138
      %1149 = vst [vmem:[#allocation3 + $0x20] sm:$0xff] %v1139
      %v1150 = vld [vmem:[#allocation3 + $0x18] sm:$0xff]
      %v1151 = vld [vmem:[#allocation3 + $0x20] sm:$0xff]
      %1152 = vst [vmem:[#allocation4] sm:$0xff] %v1150
      %1153 = vst [vmem:[#allocation4 + $0x8] sm:$0xff] %v1151
      %v1154 = vld [vmem:[#allocation3 + $0x10] sm:$0xff]
      %v1155 = vld [vmem:[#allocation3 + $0x18] sm:$0xff]
      %v1156 = vld [vmem:[#allocation3 + $0x20] sm:$0xff]
      %s1157 = scalar_lea.vmem %s1, 2
      %v1158 = vld [vmem:[%s1157] ss:$8 sm:$0x3]
      %v1160 = vlaneseq
      %v1161 = vshrl.u32 %v1160, 7
      %v1162 = vsub.s32 0, %v1161
      %v1163 = vrot.slane %v1158, %v1162
      %v1164 = vlaneseq
      %v1165 = vshrl.u32 %v1164, 7
      %v1166 = vsub.s32 1, %v1165
      %v1167 = vrot.slane %v1158, %v1166
      %1168 = vrot.lane.b32.xlu0 %v1163, 26
      %v1169 = vpop.permute.xlu0 %1168
      %1170 = vrot.lane.b32.xlu0 %v1167, 26
      %v1171 = vpop.permute.xlu0 %1170
      %vm1172 = vcmask 211968
      %v1173 = vsel %vm1172, %v1169, %v1171
      %v1177 = vmul.f32 %v1154, %v1169
      %v1178 = vmul.f32 %v1155, %v1173
      %v1179 = vmul.f32 %v1156, %v1171
      %1183 = vrot.lane.b32.xlu0 %v1177, 102
      %v1184 = vpop.permute.xlu0 %1183
      %1185 = vrot.lane.b32.xlu0 %v1178, 102
      %v1186 = vpop.permute.xlu0 %1185
      %1187 = vrot.lane.b32.xlu0 %v1179, 102
      %v1188 = vpop.permute.xlu0 %1187
      %vm1189 = vcmask 834560
      %v1190 = vsel %vm1189, %v1184, %v1186
      %v1191 = vsel %vm1189, %v1186, %v1188
      %1194 = vst [vmem:[#allocation4 + $0x10] sm:$0xff] %v1190
      %1195 = vst [vmem:[#allocation4 + $0x18] sm:$0xff] %v1191
      %v1196 = vld [vmem:[#allocation3 + $0x10] sm:$0xff]
      %v1197 = vld [vmem:[#allocation3 + $0x18] sm:$0xff]
      %v1198 = vld [vmem:[#allocation3 + $0x20] sm:$0xff]
      %1202 = vrot.lane.b32.xlu0 %v1196, 96
      %v1203 = vpop.permute.xlu0 %1202
      %1204 = vrot.lane.b32.xlu0 %v1197, 96
      %v1205 = vpop.permute.xlu0 %1204
      %1206 = vrot.lane.b32.xlu0 %v1198, 96
      %v1207 = vpop.permute.xlu0 %1206
      %vm1208 = vcmask 785408
      %v1209 = vsel %vm1208, %v1203, %v1205
      %v1210 = vsel %vm1208, %v1205, %v1207
      %1213 = vst [vmem:[#allocation4 + $0x20] sm:$0xff] %v1209
      %1214 = vst [vmem:[#allocation4 + $0x28] sm:$0xff] %v1210
      %v1215 = vld [vmem:[#allocation3 + $0x10] sm:$0xff]
      %v1216 = vld [vmem:[#allocation3 + $0x18] sm:$0xff]
      %v1217 = vld [vmem:[#allocation3 + $0x20] sm:$0xff]
      %s1218 = scalar_lea.vmem %s1, 5
      %v1219 = vld [vmem:[%s1218] ss:$8 sm:$0x3]
      %v1221 = vlaneseq
      %v1222 = vshrl.u32 %v1221, 7
      %v1223 = vsub.s32 0, %v1222
      %v1224 = vrot.slane %v1219, %v1223
      %v1225 = vlaneseq
      %v1226 = vshrl.u32 %v1225, 7
      %v1227 = vsub.s32 1, %v1226
      %v1228 = vrot.slane %v1219, %v1227
      %1229 = vrot.lane.b32.xlu0 %v1224, 38
      %v1230 = vpop.permute.xlu0 %1229
      %1231 = vrot.lane.b32.xlu0 %v1228, 38
      %v1232 = vpop.permute.xlu0 %1231
      %vm1233 = vcmask 310272
      %v1234 = vsel %vm1233, %v1230, %v1232
      %v1238 = vmul.f32 %v1215, %v1230
      %v1239 = vmul.f32 %v1216, %v1234
      %v1240 = vmul.f32 %v1217, %v1232
      %1244 = vrot.lane.b32.xlu0 %v1238, 90
      %v1245 = vpop.permute.xlu0 %1244
      %1246 = vrot.lane.b32.xlu0 %v1239, 90
      %v1247 = vpop.permute.xlu0 %1246
      %1248 = vrot.lane.b32.xlu0 %v1240, 90
      %v1249 = vpop.permute.xlu0 %1248
      %vm1250 = vcmask 736256
      %v1251 = vsel %vm1250, %v1245, %v1247
      %v1252 = vsel %vm1250, %v1247, %v1249
      %1255 = vst [vmem:[#allocation4 + $0x30] sm:$0xff] %v1251
      %1256 = vst [vmem:[#allocation4 + $0x38] sm:$0xff] %v1252
      %v1257 = vld [vmem:[#allocation3 + $0x10] sm:$0xff]
      %v1258 = vld [vmem:[#allocation3 + $0x18] sm:$0xff]
      %v1259 = vld [vmem:[#allocation3 + $0x20] sm:$0xff]
      %v1260 = vld [vmem:[%s1157] ss:$8 sm:$0x3]
      %v1262 = vlaneseq
      %v1263 = vshrl.u32 %v1262, 7
      %v1264 = vsub.s32 0, %v1263
      %v1265 = vrot.slane %v1260, %v1264
      %v1266 = vlaneseq
      %v1267 = vshrl.u32 %v1266, 7
      %v1268 = vsub.s32 1, %v1267
      %v1269 = vrot.slane %v1260, %v1268
      %1270 = vrot.lane.b32.xlu0 %v1265, 122
      %v1271 = vpop.permute.xlu0 %1270
      %1272 = vrot.lane.b32.xlu0 %v1269, 122
      %v1273 = vpop.permute.xlu0 %1272
      %vm1274 = vcmask 998400
      %v1275 = vsel %vm1274, %v1271, %v1273
      %v1279 = vmul.f32 %v1257, %v1271
      %v1280 = vmul.f32 %v1258, %v1275
      %v1281 = vmul.f32 %v1259, %v1273
      %1285 = vrot.lane.b32.xlu0 %v1279, 6
      %v1286 = vpop.permute.xlu0 %1285
      %1287 = vrot.lane.b32.xlu0 %v1280, 6
      %v1288 = vpop.permute.xlu0 %1287
      %1289 = vrot.lane.b32.xlu0 %v1281, 6
      %v1290 = vpop.permute.xlu0 %1289
      %vm1291 = vcmask 48128
      %v1292 = vsel %vm1291, %v1286, %v1288
      %v1293 = vsel %vm1291, %v1288, %v1290
      %1296 = vst [vmem:[#allocation4 + $0x40] sm:$0xff] %v1292
      %1297 = vst [vmem:[#allocation4 + $0x48] sm:$0xff] %v1293
      %v1298 = vld [vmem:[#allocation3 + $0x18] sm:$0xff]
      %v1299 = vld [vmem:[#allocation3 + $0x20] sm:$0xff]
      %v1300 = vld [vmem:[#allocation3 + $0x28] sm:$0xff]
      %v1301 = vld [vmem:[%s1218] ss:$8 sm:$0x3]
      %v1303 = vlaneseq
      %v1304 = vshrl.u32 %v1303, 7
      %v1305 = vsub.s32 0, %v1304
      %v1306 = vrot.slane %v1301, %v1305
      %v1307 = vlaneseq
      %v1308 = vshrl.u32 %v1307, 7
      %v1309 = vsub.s32 1, %v1308
      %v1310 = vrot.slane %v1301, %v1309
      %1311 = vrot.lane.b32.xlu0 %v1306, 6
      %v1312 = vpop.permute.xlu0 %1311
      %1313 = vrot.lane.b32.xlu0 %v1310, 6
      %v1314 = vpop.permute.xlu0 %1313
      %v1315 = vsel %vm1291, %v1312, %v1314
      %v1319 = vmul.f32 %v1298, %v1312
      %v1320 = vmul.f32 %v1299, %v1315
      %v1321 = vmul.f32 %v1300, %v1314
      %1325 = vrot.lane.b32.xlu0 %v1319, 122
      %v1326 = vpop.permute.xlu0 %1325
      %1327 = vrot.lane.b32.xlu0 %v1320, 122
      %v1328 = vpop.permute.xlu0 %1327
      %1329 = vrot.lane.b32.xlu0 %v1321, 122
      %v1330 = vpop.permute.xlu0 %1329
      %v1331 = vsel %vm1274, %v1326, %v1328
      %v1332 = vsel %vm1274, %v1328, %v1330
      %1335 = vst [vmem:[#allocation4 + $0x50] sm:$0xff] %v1331
      %1336 = vst [vmem:[#allocation4 + $0x58] sm:$0xff] %v1332
      %v1337 = vld [vmem:[#allocation3 + $0x18] sm:$0xff]
      %v1338 = vld [vmem:[#allocation3 + $0x20] sm:$0xff]
      %v1339 = vld [vmem:[#allocation3 + $0x28] sm:$0xff]
      %v1340 = vld [vmem:[%s1157] ss:$8 sm:$0x3]
      %v1342 = vlaneseq
      %v1343 = vshrl.u32 %v1342, 7
      %v1344 = vsub.s32 0, %v1343
      %v1345 = vrot.slane %v1340, %v1344
      %v1346 = vlaneseq
      %v1347 = vshrl.u32 %v1346, 7
      %v1348 = vsub.s32 1, %v1347
      %v1349 = vrot.slane %v1340, %v1348
      %1350 = vrot.lane.b32.xlu0 %v1345, 90
      %v1351 = vpop.permute.xlu0 %1350
      %1352 = vrot.lane.b32.xlu0 %v1349, 90
      %v1353 = vpop.permute.xlu0 %1352
      %v1354 = vsel %vm1250, %v1351, %v1353
      %v1358 = vmul.f32 %v1337, %v1351
      %v1359 = vmul.f32 %v1338, %v1354
      %v1360 = vmul.f32 %v1339, %v1353
      %1364 = vrot.lane.b32.xlu0 %v1358, 38
      %v1365 = vpop.permute.xlu0 %1364
      %1366 = vrot.lane.b32.xlu0 %v1359, 38
      %v1367 = vpop.permute.xlu0 %1366
      %1368 = vrot.lane.b32.xlu0 %v1360, 38
      %v1369 = vpop.permute.xlu0 %1368
      %v1370 = vsel %vm1233, %v1365, %v1367
      %v1371 = vsel %vm1233, %v1367, %v1369
      %1374 = vst [vmem:[#allocation4 + $0x60] sm:$0xff] %v1370
      %1375 = vst [vmem:[#allocation4 + $0x68] sm:$0xff] %v1371
      %v1376 = vld [vmem:[#allocation3 + $0x18] sm:$0xff]
      %v1377 = vld [vmem:[#allocation3 + $0x20] sm:$0xff]
      %v1378 = vld [vmem:[#allocation3 + $0x28] sm:$0xff]
      %1382 = vrot.lane.b32.xlu0 %v1376, 32
      %v1383 = vpop.permute.xlu0 %1382
      %1384 = vrot.lane.b32.xlu0 %v1377, 32
      %v1385 = vpop.permute.xlu0 %1384
      %1386 = vrot.lane.b32.xlu0 %v1378, 32
      %v1387 = vpop.permute.xlu0 %1386
      %vm1388 = vcmask 261120
      %v1389 = vsel %vm1388, %v1383, %v1385
      %v1390 = vsel %vm1388, %v1385, %v1387
      %1393 = vst [vmem:[#allocation4 + $0x70] sm:$0xff] %v1389
      %1394 = vst [vmem:[#allocation4 + $0x78] sm:$0xff] %v1390
      %v1395 = vld [vmem:[#allocation3 + $0x18] sm:$0xff]
      %v1396 = vld [vmem:[#allocation3 + $0x20] sm:$0xff]
      %v1397 = vld [vmem:[#allocation3 + $0x28] sm:$0xff]
      %v1398 = vld [vmem:[%s1218] ss:$8 sm:$0x3]
      %v1400 = vlaneseq
      %v1401 = vshrl.u32 %v1400, 7
      %v1402 = vsub.s32 0, %v1401
      %v1403 = vrot.slane %v1398, %v1402
      %v1404 = vlaneseq
      %v1405 = vshrl.u32 %v1404, 7
      %v1406 = vsub.s32 1, %v1405
      %v1407 = vrot.slane %v1398, %v1406
      %1408 = vrot.lane.b32.xlu0 %v1403, 102
      %v1409 = vpop.permute.xlu0 %1408
      %1410 = vrot.lane.b32.xlu0 %v1407, 102
      %v1411 = vpop.permute.xlu0 %1410
      %v1412 = vsel %vm1189, %v1409, %v1411
      %v1416 = vmul.f32 %v1395, %v1409
      %v1417 = vmul.f32 %v1396, %v1412
      %v1418 = vmul.f32 %v1397, %v1411
      %1422 = vrot.lane.b32.xlu0 %v1416, 26
      %v1423 = vpop.permute.xlu0 %1422
      %1424 = vrot.lane.b32.xlu0 %v1417, 26
      %v1425 = vpop.permute.xlu0 %1424
      %1426 = vrot.lane.b32.xlu0 %v1418, 26
      %v1427 = vpop.permute.xlu0 %1426
      %v1428 = vsel %vm1172, %v1423, %v1425
      %v1429 = vsel %vm1172, %v1425, %v1427
      %1432 = vst [vmem:[#allocation4 + $0x80] sm:$0xff] %v1428
      %1433 = vst [vmem:[#allocation4 + $0x88] sm:$0xff] %v1429
      %v1434 = vld [vmem:[#allocation3 + $0x8] sm:$0xff]
      %v1435 = vld [vmem:[#allocation3 + $0x10] sm:$0xff]
      %v1436 = vld [vmem:[#allocation3 + $0x18] sm:$0xff]
      %s1437 = scalar_lea.vmem %s1, 1
      %v1438 = vld [vmem:[%s1437] ss:$8 sm:$0x3]
      %v1440 = vlaneseq
      %v1441 = vshrl.u32 %v1440, 7
      %v1442 = vsub.s32 0, %v1441
      %v1443 = vrot.slane %v1438, %v1442
      %v1444 = vlaneseq
      %v1445 = vshrl.u32 %v1444, 7
      %v1446 = vsub.s32 1, %v1445
      %v1447 = vrot.slane %v1438, %v1446
      %1448 = vrot.lane.b32.xlu0 %v1443, 52
      %v1449 = vpop.permute.xlu0 %1448
      %1450 = vrot.lane.b32.xlu0 %v1447, 52
      %v1451 = vpop.permute.xlu0 %1450
      %vm1452 = vcmask 424960
      %v1453 = vsel %vm1452, %v1449, %v1451
      %v1457 = vmul.f32 %v1434, %v1449
      %v1458 = vmul.f32 %v1435, %v1453
      %v1459 = vmul.f32 %v1436, %v1451
      %1463 = vrot.lane.b32.xlu0 %v1457, 76
      %v1464 = vpop.permute.xlu0 %1463
      %1465 = vrot.lane.b32.xlu0 %v1458, 76
      %v1466 = vpop.permute.xlu0 %1465
      %1467 = vrot.lane.b32.xlu0 %v1459, 76
      %v1468 = vpop.permute.xlu0 %1467
      %vm1469 = vcmask 621568
      %v1470 = vsel %vm1469, %v1464, %v1466
      %v1471 = vsel %vm1469, %v1466, %v1468
      %1474 = vst [vmem:[#allocation4 + $0x90] sm:$0xff] %v1470
      %1475 = vst [vmem:[#allocation4 + $0x98] sm:$0xff] %v1471
      %v1476 = vld [vmem:[#allocation3 + $0x8] sm:$0xff]
      %v1477 = vld [vmem:[#allocation3 + $0x10] sm:$0xff]
      %v1478 = vld [vmem:[#allocation3 + $0x18] sm:$0xff]
      %1482 = vrot.lane.b32.xlu0 %v1476, 64
      %v1483 = vpop.permute.xlu0 %1482
      %1484 = vrot.lane.b32.xlu0 %v1477, 64
      %v1485 = vpop.permute.xlu0 %1484
      %1486 = vrot.lane.b32.xlu0 %v1478, 64
      %v1487 = vpop.permute.xlu0 %1486
      %vm1488 = vcmask 523264
      %v1489 = vsel %vm1488, %v1483, %v1485
      %v1490 = vsel %vm1488, %v1485, %v1487
      %1493 = vst [vmem:[#allocation4 + $0xa0] sm:$0xff] %v1489
      %1494 = vst [vmem:[#allocation4 + $0xa8] sm:$0xff] %v1490
      %v1495 = vld [vmem:[#allocation3 + $0x8] sm:$0xff]
      %v1496 = vld [vmem:[#allocation3 + $0x10] sm:$0xff]
      %v1497 = vld [vmem:[#allocation3 + $0x18] sm:$0xff]
      %s1498 = scalar_lea.vmem %s1, 6
      %v1499 = vld [vmem:[%s1498] ss:$8 sm:$0x3]
      %v1501 = vlaneseq
      %v1502 = vshrl.u32 %v1501, 7
      %v1503 = vsub.s32 0, %v1502
      %v1504 = vrot.slane %v1499, %v1503
      %v1505 = vlaneseq
      %v1506 = vshrl.u32 %v1505, 7
      %v1507 = vsub.s32 1, %v1506
      %v1508 = vrot.slane %v1499, %v1507
      %1509 = vrot.lane.b32.xlu0 %v1504, 76
      %v1510 = vpop.permute.xlu0 %1509
      %1511 = vrot.lane.b32.xlu0 %v1508, 76
      %v1512 = vpop.permute.xlu0 %1511
      %v1513 = vsel %vm1469, %v1510, %v1512
      %v1517 = vmul.f32 %v1495, %v1510
      %v1518 = vmul.f32 %v1496, %v1513
      %v1519 = vmul.f32 %v1497, %v1512
      %1523 = vrot.lane.b32.xlu0 %v1517, 52
      %v1524 = vpop.permute.xlu0 %1523
      %1525 = vrot.lane.b32.xlu0 %v1518, 52
      %v1526 = vpop.permute.xlu0 %1525
      %1527 = vrot.lane.b32.xlu0 %v1519, 52
      %v1528 = vpop.permute.xlu0 %1527
      %v1529 = vsel %vm1452, %v1524, %v1526
      %v1530 = vsel %vm1452, %v1526, %v1528
      %1533 = vst [vmem:[#allocation4 + $0xb0] sm:$0xff] %v1529
      %1534 = vst [vmem:[#allocation4 + $0xb8] sm:$0xff] %v1530
      %v1535 = vld [vmem:[#allocation3 + $0x10] sm:$0xff]
      %v1536 = vld [vmem:[#allocation3 + $0x18] sm:$0xff]
      %v1537 = vld [vmem:[#allocation3 + $0x20] sm:$0xff]
      %v1538 = vld [vmem:[%s1437] ss:$8 sm:$0x3]
      %v1540 = vlaneseq
      %v1541 = vshrl.u32 %v1540, 7
      %v1542 = vsub.s32 0, %v1541
      %v1543 = vrot.slane %v1538, %v1542
      %v1544 = vlaneseq
      %v1545 = vshrl.u32 %v1544, 7
      %v1546 = vsub.s32 1, %v1545
      %v1547 = vrot.slane %v1538, %v1546
      %1548 = vrot.lane.b32.xlu0 %v1543, 116
      %v1549 = vpop.permute.xlu0 %1548
      %1550 = vrot.lane.b32.xlu0 %v1547, 116
      %v1551 = vpop.permute.xlu0 %1550
      %vm1552 = vcmask 949248
      %v1553 = vsel %vm1552, %v1549, %v1551
      %v1557 = vmul.f32 %v1535, %v1549
      %v1558 = vmul.f32 %v1536, %v1553
      %v1559 = vmul.f32 %v1537, %v1551
      %1563 = vrot.lane.b32.xlu0 %v1557, 12
      %v1564 = vpop.permute.xlu0 %1563
      %1565 = vrot.lane.b32.xlu0 %v1558, 12
      %v1566 = vpop.permute.xlu0 %1565
      %1567 = vrot.lane.b32.xlu0 %v1559, 12
      %v1568 = vpop.permute.xlu0 %1567
      %vm1569 = vcmask 97280
      %v1570 = vsel %vm1569, %v1564, %v1566
      %v1571 = vsel %vm1569, %v1566, %v1568
      %1574 = vst [vmem:[#allocation4 + $0xc0] sm:$0xff] %v1570
      %1575 = vst [vmem:[#allocation4 + $0xc8] sm:$0xff] %v1571
      %v1576 = vld [vmem:[#allocation3 + $0x18] sm:$0xff]
      %v1577 = vld [vmem:[#allocation3 + $0x20] sm:$0xff]
      %v1578 = vld [vmem:[#allocation3 + $0x28] sm:$0xff]
      %v1579 = vld [vmem:[%s1498] ss:$8 sm:$0x3]
      %v1581 = vlaneseq
      %v1582 = vshrl.u32 %v1581, 7
      %v1583 = vsub.s32 0, %v1582
      %v1584 = vrot.slane %v1579, %v1583
      %v1585 = vlaneseq
      %v1586 = vshrl.u32 %v1585, 7
      %v1587 = vsub.s32 1, %v1586
      %v1588 = vrot.slane %v1579, %v1587
      %1589 = vrot.lane.b32.xlu0 %v1584, 12
      %v1590 = vpop.permute.xlu0 %1589
      %1591 = vrot.lane.b32.xlu0 %v1588, 12
      %v1592 = vpop.permute.xlu0 %1591
      %v1593 = vsel %vm1569, %v1590, %v1592
      %v1597 = vmul.f32 %v1576, %v1590
      %v1598 = vmul.f32 %v1577, %v1593
      %v1599 = vmul.f32 %v1578, %v1592
      %1603 = vrot.lane.b32.xlu0 %v1597, 116
      %v1604 = vpop.permute.xlu0 %1603
      %1605 = vrot.lane.b32.xlu0 %v1598, 116
      %v1606 = vpop.permute.xlu0 %1605
      %1607 = vrot.lane.b32.xlu0 %v1599, 116
      %v1608 = vpop.permute.xlu0 %1607
      %v1609 = vsel %vm1552, %v1604, %v1606
      %v1610 = vsel %vm1552, %v1606, %v1608
      %1613 = vst [vmem:[#allocation4 + $0xd0] sm:$0xff] %v1609
      %1614 = vst [vmem:[#allocation4 + $0xd8] sm:$0xff] %v1610
      %v1615 = vld [vmem:[#allocation3 + $0x20] sm:$0xff]
      %v1616 = vld [vmem:[#allocation3 + $0x28] sm:$0xff]
      %v1617 = vld [vmem:[#allocation3 + $0x30] sm:$0xff]
      %v1618 = vld [vmem:[%s1437] ss:$8 sm:$0x3]
      %v1620 = vlaneseq
      %v1621 = vshrl.u32 %v1620, 7
      %v1622 = vsub.s32 0, %v1621
      %v1623 = vrot.slane %v1618, %v1622
      %v1624 = vlaneseq
      %v1625 = vshrl.u32 %v1624, 7
      %v1626 = vsub.s32 1, %v1625
      %v1627 = vrot.slane %v1618, %v1626
      %1628 = vrot.lane.b32.xlu0 %v1623, 52
      %v1629 = vpop.permute.xlu0 %1628
      %1630 = vrot.lane.b32.xlu0 %v1627, 52
      %v1631 = vpop.permute.xlu0 %1630
      %v1632 = vsel %vm1452, %v1629, %v1631
      %v1636 = vmul.f32 %v1615, %v1629
      %v1637 = vmul.f32 %v1616, %v1632
      %v1638 = vmul.f32 %v1617, %v1631
      %1642 = vrot.lane.b32.xlu0 %v1636, 76
      %v1643 = vpop.permute.xlu0 %1642
      %1644 = vrot.lane.b32.xlu0 %v1637, 76
      %v1645 = vpop.permute.xlu0 %1644
      %1646 = vrot.lane.b32.xlu0 %v1638, 76
      %v1647 = vpop.permute.xlu0 %1646
      %v1648 = vsel %vm1469, %v1643, %v1645
      %v1649 = vsel %vm1469, %v1645, %v1647
      %1652 = vst [vmem:[#allocation4 + $0xe0] sm:$0xff] %v1648
      %1653 = vst [vmem:[#allocation4 + $0xe8] sm:$0xff] %v1649
      %v1654 = vld [vmem:[#allocation3 + $0x20] sm:$0xff]
      %v1655 = vld [vmem:[#allocation3 + $0x28] sm:$0xff]
      %v1656 = vld [vmem:[#allocation3 + $0x30] sm:$0xff]
      %1660 = vrot.lane.b32.xlu0 %v1654, 64
      %v1661 = vpop.permute.xlu0 %1660
      %1662 = vrot.lane.b32.xlu0 %v1655, 64
      %v1663 = vpop.permute.xlu0 %1662
      %1664 = vrot.lane.b32.xlu0 %v1656, 64
      %v1665 = vpop.permute.xlu0 %1664
      %v1666 = vsel %vm1488, %v1661, %v1663
      %v1667 = vsel %vm1488, %v1663, %v1665
      %1670 = vst [vmem:[#allocation4 + $0xf0] sm:$0xff] %v1666
      %1671 = vst [vmem:[#allocation4 + $0xf8] sm:$0xff] %v1667
      %v1672 = vld [vmem:[#allocation3 + $0x20] sm:$0xff]
      %v1673 = vld [vmem:[#allocation3 + $0x28] sm:$0xff]
      %v1674 = vld [vmem:[#allocation3 + $0x30] sm:$0xff]
      %v1675 = vld [vmem:[%s1498] ss:$8 sm:$0x3]
      %v1677 = vlaneseq
      %v1678 = vshrl.u32 %v1677, 7
      %v1679 = vsub.s32 0, %v1678
      %v1680 = vrot.slane %v1675, %v1679
      %v1681 = vlaneseq
      %v1682 = vshrl.u32 %v1681, 7
      %v1683 = vsub.s32 1, %v1682
      %v1684 = vrot.slane %v1675, %v1683
      %1685 = vrot.lane.b32.xlu0 %v1680, 76
      %v1686 = vpop.permute.xlu0 %1685
      %1687 = vrot.lane.b32.xlu0 %v1684, 76
      %v1688 = vpop.permute.xlu0 %1687
      %v1689 = vsel %vm1469, %v1686, %v1688
      %v1693 = vmul.f32 %v1672, %v1686
      %v1694 = vmul.f32 %v1673, %v1689
      %v1695 = vmul.f32 %v1674, %v1688
      %1699 = vrot.lane.b32.xlu0 %v1693, 52
      %v1700 = vpop.permute.xlu0 %1699
      %1701 = vrot.lane.b32.xlu0 %v1694, 52
      %v1702 = vpop.permute.xlu0 %1701
      %1703 = vrot.lane.b32.xlu0 %v1695, 52
      %v1704 = vpop.permute.xlu0 %1703
      %v1705 = vsel %vm1452, %v1700, %v1702
      %v1706 = vsel %vm1452, %v1702, %v1704
      %1709 = vst [vmem:[#allocation4 + $0x100] sm:$0xff] %v1705
      %1710 = vst [vmem:[#allocation4 + $0x108] sm:$0xff] %v1706
      %v1711 = vld [vmem:[#allocation3] sm:$0xff]
      %v1712 = vld [vmem:[#allocation3 + $0x8] sm:$0xff]
      %v1713 = vld [vmem:[#allocation3 + $0x10] sm:$0xff]
      %v1714 = vld [vmem:[%s1] ss:$8 sm:$0x3]
      %v1716 = vlaneseq
      %v1717 = vshrl.u32 %v1716, 7
      %v1718 = vsub.s32 0, %v1717
      %v1719 = vrot.slane %v1714, %v1718
      %v1720 = vlaneseq
      %v1721 = vshrl.u32 %v1720, 7
      %v1722 = vsub.s32 1, %v1721
      %v1723 = vrot.slane %v1714, %v1722
      %1724 = vrot.lane.b32.xlu0 %v1719, 78
      %v1725 = vpop.permute.xlu0 %1724
      %1726 = vrot.lane.b32.xlu0 %v1723, 78
      %v1727 = vpop.permute.xlu0 %1726
      %vm1728 = vcmask 637952
      %v1729 = vsel %vm1728, %v1725, %v1727
      %v1733 = vmul.f32 %v1711, %v1725
      %v1734 = vmul.f32 %v1712, %v1729
      %v1735 = vmul.f32 %v1713, %v1727
      %1739 = vrot.lane.b32.xlu0 %v1733, 50
      %v1740 = vpop.permute.xlu0 %1739
      %1741 = vrot.lane.b32.xlu0 %v1734, 50
      %v1742 = vpop.permute.xlu0 %1741
      %1743 = vrot.lane.b32.xlu0 %v1735, 50
      %v1744 = vpop.permute.xlu0 %1743
      %vm1745 = vcmask 408576
      %v1746 = vsel %vm1745, %v1740, %v1742
      %v1747 = vsel %vm1745, %v1742, %v1744
      %1750 = vst [vmem:[#allocation4 + $0x110] sm:$0xff] %v1746
      %1751 = vst [vmem:[#allocation4 + $0x118] sm:$0xff] %v1747
      %v1752 = vld [vmem:[#allocation3] sm:$0xff]
      %v1753 = vld [vmem:[#allocation3 + $0x8] sm:$0xff]
      %v1754 = vld [vmem:[#allocation3 + $0x10] sm:$0xff]
      %1758 = vrot.lane.b32.xlu0 %v1752, 32
      %v1759 = vpop.permute.xlu0 %1758
      %1760 = vrot.lane.b32.xlu0 %v1753, 32
      %v1761 = vpop.permute.xlu0 %1760
      %1762 = vrot.lane.b32.xlu0 %v1754, 32
      %v1763 = vpop.permute.xlu0 %1762
      %v1764 = vsel %vm1388, %v1759, %v1761
      %v1765 = vsel %vm1388, %v1761, %v1763
      %1768 = vst [vmem:[#allocation4 + $0x120] sm:$0xff] %v1764
      %1769 = vst [vmem:[#allocation4 + $0x128] sm:$0xff] %v1765
      %v1770 = vld [vmem:[#allocation3] sm:$0xff]
      %v1771 = vld [vmem:[#allocation3 + $0x8] sm:$0xff]
      %v1772 = vld [vmem:[#allocation3 + $0x10] sm:$0xff]
      %s1773 = scalar_lea.vmem %s1, 7
      %v1774 = vld [vmem:[%s1773] ss:$8 sm:$0x3]
      %v1776 = vlaneseq
      %v1777 = vshrl.u32 %v1776, 7
      %v1778 = vsub.s32 0, %v1777
      %v1779 = vrot.slane %v1774, %v1778
      %v1780 = vlaneseq
      %v1781 = vshrl.u32 %v1780, 7
      %v1782 = vsub.s32 1, %v1781
      %v1783 = vrot.slane %v1774, %v1782
      %1784 = vrot.lane.b32.xlu0 %v1779, 114
      %v1785 = vpop.permute.xlu0 %1784
      %1786 = vrot.lane.b32.xlu0 %v1783, 114
      %v1787 = vpop.permute.xlu0 %1786
      %vm1788 = vcmask 932864
      %v1789 = vsel %vm1788, %v1785, %v1787
      %v1793 = vmul.f32 %v1770, %v1785
      %v1794 = vmul.f32 %v1771, %v1789
      %v1795 = vmul.f32 %v1772, %v1787
      %1799 = vrot.lane.b32.xlu0 %v1793, 14
      %v1800 = vpop.permute.xlu0 %1799
      %1801 = vrot.lane.b32.xlu0 %v1794, 14
      %v1802 = vpop.permute.xlu0 %1801
      %1803 = vrot.lane.b32.xlu0 %v1795, 14
      %v1804 = vpop.permute.xlu0 %1803
      %vm1805 = vcmask 113664
      %v1806 = vsel %vm1805, %v1800, %v1802
      %v1807 = vsel %vm1805, %v1802, %v1804
      %1810 = vst [vmem:[#allocation4 + $0x130] sm:$0xff] %v1806
      %1811 = vst [vmem:[#allocation4 + $0x138] sm:$0xff] %v1807
      %v1812 = vld [vmem:[#allocation3 + $0x10] sm:$0xff]
      %v1813 = vld [vmem:[#allocation3 + $0x18] sm:$0xff]
      %v1814 = vld [vmem:[#allocation3 + $0x20] sm:$0xff]
      %v1815 = vld [vmem:[%s1] ss:$8 sm:$0x3]
      %v1817 = vlaneseq
      %v1818 = vshrl.u32 %v1817, 7
      %v1819 = vsub.s32 0, %v1818
      %v1820 = vrot.slane %v1815, %v1819
      %v1821 = vlaneseq
      %v1822 = vshrl.u32 %v1821, 7
      %v1823 = vsub.s32 1, %v1822
      %v1824 = vrot.slane %v1815, %v1823
      %1825 = vrot.lane.b32.xlu0 %v1820, 110
      %v1826 = vpop.permute.xlu0 %1825
      %1827 = vrot.lane.b32.xlu0 %v1824, 110
      %v1828 = vpop.permute.xlu0 %1827
      %vm1829 = vcmask 900096
      %v1830 = vsel %vm1829, %v1826, %v1828
      %v1834 = vmul.f32 %v1812, %v1826
      %v1835 = vmul.f32 %v1813, %v1830
      %v1836 = vmul.f32 %v1814, %v1828
      %1840 = vrot.lane.b32.xlu0 %v1834, 18
      %v1841 = vpop.permute.xlu0 %1840
      %1842 = vrot.lane.b32.xlu0 %v1835, 18
      %v1843 = vpop.permute.xlu0 %1842
      %1844 = vrot.lane.b32.xlu0 %v1836, 18
      %v1845 = vpop.permute.xlu0 %1844
      %vm1846 = vcmask 146432
      %v1847 = vsel %vm1846, %v1841, %v1843
      %v1848 = vsel %vm1846, %v1843, %v1845
      %1851 = vst [vmem:[#allocation4 + $0x140] sm:$0xff] %v1847
      %1852 = vst [vmem:[#allocation4 + $0x148] sm:$0xff] %v1848
      %v1853 = vld [vmem:[#allocation3 + $0x18] sm:$0xff]
      %v1854 = vld [vmem:[#allocation3 + $0x20] sm:$0xff]
      %v1855 = vld [vmem:[#allocation3 + $0x28] sm:$0xff]
      %v1856 = vld [vmem:[%s1773] ss:$8 sm:$0x3]
      %v1858 = vlaneseq
      %v1859 = vshrl.u32 %v1858, 7
      %v1860 = vsub.s32 0, %v1859
      %v1861 = vrot.slane %v1856, %v1860
      %v1862 = vlaneseq
      %v1863 = vshrl.u32 %v1862, 7
      %v1864 = vsub.s32 1, %v1863
      %v1865 = vrot.slane %v1856, %v1864
      %1866 = vrot.lane.b32.xlu0 %v1861, 18
      %v1867 = vpop.permute.xlu0 %1866
      %1868 = vrot.lane.b32.xlu0 %v1865, 18
      %v1869 = vpop.permute.xlu0 %1868
      %v1870 = vsel %vm1846, %v1867, %v1869
      %v1874 = vmul.f32 %v1853, %v1867
      %v1875 = vmul.f32 %v1854, %v1870
      %v1876 = vmul.f32 %v1855, %v1869
      %1880 = vrot.lane.b32.xlu0 %v1874, 110
      %v1881 = vpop.permute.xlu0 %1880
      %1882 = vrot.lane.b32.xlu0 %v1875, 110
      %v1883 = vpop.permute.xlu0 %1882
      %1884 = vrot.lane.b32.xlu0 %v1876, 110
      %v1885 = vpop.permute.xlu0 %1884
      %v1886 = vsel %vm1829, %v1881, %v1883
      %v1887 = vsel %vm1829, %v1883, %v1885
      %1890 = vst [vmem:[#allocation4 + $0x150] sm:$0xff] %v1886
      %1891 = vst [vmem:[#allocation4 + $0x158] sm:$0xff] %v1887
      %v1892 = vld [vmem:[#allocation3 + $0x28] sm:$0xff]
      %v1893 = vld [vmem:[#allocation3 + $0x30] sm:$0xff]
      %v1894 = vld [vmem:[#allocation3 + $0x38] sm:$0xff]
      %v1895 = vld [vmem:[%s1] ss:$8 sm:$0x3]
      %v1897 = vlaneseq
      %v1898 = vshrl.u32 %v1897, 7
      %v1899 = vsub.s32 0, %v1898
      %v1900 = vrot.slane %v1895, %v1899
      %v1901 = vlaneseq
      %v1902 = vshrl.u32 %v1901, 7
      %v1903 = vsub.s32 1, %v1902
      %v1904 = vrot.slane %v1895, %v1903
      %1905 = vrot.lane.b32.xlu0 %v1900, 14
      %v1906 = vpop.permute.xlu0 %1905
      %1907 = vrot.lane.b32.xlu0 %v1904, 14
      %v1908 = vpop.permute.xlu0 %1907
      %v1909 = vsel %vm1805, %v1906, %v1908
      %v1913 = vmul.f32 %v1892, %v1906
      %v1914 = vmul.f32 %v1893, %v1909
      %v1915 = vmul.f32 %v1894, %v1908
      %1919 = vrot.lane.b32.xlu0 %v1913, 114
      %v1920 = vpop.permute.xlu0 %1919
      %1921 = vrot.lane.b32.xlu0 %v1914, 114
      %v1922 = vpop.permute.xlu0 %1921
      %1923 = vrot.lane.b32.xlu0 %v1915, 114
      %v1924 = vpop.permute.xlu0 %1923
      %v1925 = vsel %vm1788, %v1920, %v1922
      %v1926 = vsel %vm1788, %v1922, %v1924
      %1929 = vst [vmem:[#allocation4 + $0x160] sm:$0xff] %v1925
      %1930 = vst [vmem:[#allocation4 + $0x168] sm:$0xff] %v1926
      %v1931 = vld [vmem:[#allocation3 + $0x28] sm:$0xff]
      %v1932 = vld [vmem:[#allocation3 + $0x30] sm:$0xff]
      %v1933 = vld [vmem:[#allocation3 + $0x38] sm:$0xff]
      %1937 = vrot.lane.b32.xlu0 %v1931, 96
      %v1938 = vpop.permute.xlu0 %1937
      %1939 = vrot.lane.b32.xlu0 %v1932, 96
      %v1940 = vpop.permute.xlu0 %1939
      %1941 = vrot.lane.b32.xlu0 %v1933, 96
      %v1942 = vpop.permute.xlu0 %1941
      %v1943 = vsel %vm1208, %v1938, %v1940
      %v1944 = vsel %vm1208, %v1940, %v1942
      %1947 = vst [vmem:[#allocation4 + $0x170] sm:$0xff] %v1943
      %1948 = vst [vmem:[#allocation4 + $0x178] sm:$0xff] %v1944
      %v1949 = vld [vmem:[#allocation3 + $0x28] sm:$0xff]
      %v1950 = vld [vmem:[#allocation3 + $0x30] sm:$0xff]
      %v1951 = vld [vmem:[#allocation3 + $0x38] sm:$0xff]
      %v1952 = vld [vmem:[%s1773] ss:$8 sm:$0x3]
      %v1954 = vlaneseq
      %v1955 = vshrl.u32 %v1954, 7
      %v1956 = vsub.s32 0, %v1955
      %v1957 = vrot.slane %v1952, %v1956
      %v1958 = vlaneseq
      %v1959 = vshrl.u32 %v1958, 7
      %v1960 = vsub.s32 1, %v1959
      %v1961 = vrot.slane %v1952, %v1960
      %1962 = vrot.lane.b32.xlu0 %v1957, 50
      %v1963 = vpop.permute.xlu0 %1962
      %1964 = vrot.lane.b32.xlu0 %v1961, 50
      %v1965 = vpop.permute.xlu0 %1964
      %v1966 = vsel %vm1745, %v1963, %v1965
      %v1970 = vmul.f32 %v1949, %v1963
      %v1971 = vmul.f32 %v1950, %v1966
      %v1972 = vmul.f32 %v1951, %v1965
      %1976 = vrot.lane.b32.xlu0 %v1970, 78
      %v1977 = vpop.permute.xlu0 %1976
      %1978 = vrot.lane.b32.xlu0 %v1971, 78
      %v1979 = vpop.permute.xlu0 %1978
      %1980 = vrot.lane.b32.xlu0 %v1972, 78
      %v1981 = vpop.permute.xlu0 %1980
      %v1982 = vsel %vm1728, %v1977, %v1979
      %v1983 = vsel %vm1728, %v1979, %v1981
      %1986 = vst [vmem:[#allocation4 + $0x180] sm:$0xff] %v1982
      %1987 = vst [vmem:[#allocation4 + $0x188] sm:$0xff] %v1983
      %v1988 = vadd.f32 %v1138, %v1139
      %1989 = vadd.xlane.f32.xlu0 %v1988
      %v1990 = vpop.xlane.xlu0 %1989
      %v1991 = vrcp.pop 256.0
      %v1992 = vmul.f32 %v1990, %v1991
      %1993 = vst [vmem:[#allocation4 + $0x190] sm:$0xff] %v1992
      %1994 = vst [vmem:[#allocation4 + $0x198] sm:$0xff] %v1992
      %v1995 = vld [vmem:[%s5] sm:$0xff]
      %v1996 = vld [vmem:[%s5 + $0x8] sm:$0xff]
      %v1997 = vld [vmem:[%s5 + $0x10] sm:$0xff]
      %v1998 = vld [vmem:[%s5 + $0x18] sm:$0xff]
      %v1999 = vld [vmem:[%s5 + $0x20] sm:$0xff]
      %v2000 = vld [vmem:[#allocation4] sm:$0xff]
      %v2001 = vld [vmem:[#allocation4 + $0x8] sm:$0xff]
      %v2002 = vld [vmem:[#allocation4 + $0x10] sm:$0xff]
      %v2003 = vld [vmem:[#allocation4 + $0x18] sm:$0xff]
      %v2004 = vld [vmem:[#allocation4 + $0x20] sm:$0xff]
      %v2005 = vld [vmem:[#allocation4 + $0x28] sm:$0xff]
      %v2006 = vld [vmem:[#allocation4 + $0x30] sm:$0xff]
      %v2007 = vld [vmem:[#allocation4 + $0x38] sm:$0xff]
      %v2008 = vld [vmem:[#allocation4 + $0x40] sm:$0xff]
      %v2009 = vld [vmem:[#allocation4 + $0x48] sm:$0xff]
      %v2010 = vld [vmem:[#allocation4 + $0x50] sm:$0xff]
      %v2011 = vld [vmem:[#allocation4 + $0x58] sm:$0xff]
      %v2012 = vld [vmem:[#allocation4 + $0x60] sm:$0xff]
      %v2013 = vld [vmem:[#allocation4 + $0x68] sm:$0xff]
      %v2014 = vld [vmem:[#allocation4 + $0x70] sm:$0xff]
      %v2015 = vld [vmem:[#allocation4 + $0x78] sm:$0xff]
      %v2016 = vld [vmem:[#allocation4 + $0x80] sm:$0xff]
      %v2017 = vld [vmem:[#allocation4 + $0x88] sm:$0xff]
      %v2018 = vld [vmem:[#allocation4 + $0x90] sm:$0xff]
      %v2019 = vld [vmem:[#allocation4 + $0x98] sm:$0xff]
      %v2020 = vld [vmem:[#allocation4 + $0xa0] sm:$0xff]
      %v2021 = vld [vmem:[#allocation4 + $0xa8] sm:$0xff]
      %v2022 = vld [vmem:[#allocation4 + $0xb0] sm:$0xff]
      %v2023 = vld [vmem:[#allocation4 + $0xb8] sm:$0xff]
      %v2024 = vld [vmem:[#allocation4 + $0xc0] sm:$0xff]
      %v2025 = vld [vmem:[#allocation4 + $0xc8] sm:$0xff]
      %v2026 = vld [vmem:[#allocation4 + $0xd0] sm:$0xff]
      %v2027 = vld [vmem:[#allocation4 + $0xd8] sm:$0xff]
      %v2028 = vld [vmem:[#allocation4 + $0xe0] sm:$0xff]
      %v2029 = vld [vmem:[#allocation4 + $0xe8] sm:$0xff]
      %v2030 = vld [vmem:[#allocation4 + $0xf0] sm:$0xff]
      %v2031 = vld [vmem:[#allocation4 + $0xf8] sm:$0xff]
      %v2032 = vld [vmem:[#allocation4 + $0x100] sm:$0xff]
      %v2033 = vld [vmem:[#allocation4 + $0x108] sm:$0xff]
      %v2034 = vld [vmem:[#allocation4 + $0x110] sm:$0xff]
      %v2035 = vld [vmem:[#allocation4 + $0x118] sm:$0xff]
      %v2036 = vld [vmem:[#allocation4 + $0x120] sm:$0xff]
      %v2037 = vld [vmem:[#allocation4 + $0x128] sm:$0xff]
      %v2038 = vld [vmem:[#allocation4 + $0x130] sm:$0xff]
      %v2039 = vld [vmem:[#allocation4 + $0x138] sm:$0xff]
      %v2040 = vld [vmem:[#allocation4 + $0x140] sm:$0xff]
      %v2041 = vld [vmem:[#allocation4 + $0x148] sm:$0xff]
      %v2042 = vld [vmem:[#allocation4 + $0x150] sm:$0xff]
      %v2043 = vld [vmem:[#allocation4 + $0x158] sm:$0xff]
      %v2044 = vld [vmem:[#allocation4 + $0x160] sm:$0xff]
      %v2045 = vld [vmem:[#allocation4 + $0x168] sm:$0xff]
      %v2046 = vld [vmem:[#allocation4 + $0x170] sm:$0xff]
      %v2047 = vld [vmem:[#allocation4 + $0x178] sm:$0xff]
      %v2048 = vld [vmem:[#allocation4 + $0x180] sm:$0xff]
      %v2049 = vld [vmem:[#allocation4 + $0x188] sm:$0xff]
      %v2050 = vld [vmem:[#allocation4 + $0x190] sm:$0xff]
      %v2051 = vld [vmem:[#allocation4 + $0x198] sm:$0xff]
      %v2052 = vpack.c.bf16 %v2002, %v2000
      %v2053 = vpack.c.bf16 %v2003, %v2001
      %v2054 = vpack.c.bf16 %v2006, %v2004
      %v2055 = vpack.c.bf16 %v2007, %v2005
      %v2056 = vpack.c.bf16 %v2010, %v2008
      %v2057 = vpack.c.bf16 %v2011, %v2009
      %v2058 = vpack.c.bf16 %v2014, %v2012
      %v2059 = vpack.c.bf16 %v2015, %v2013
      %v2060 = vpack.c.bf16 %v2018, %v2016
      %v2061 = vpack.c.bf16 %v2019, %v2017
      %v2062 = vpack.c.bf16 %v2022, %v2020
      %v2063 = vpack.c.bf16 %v2023, %v2021
      %v2064 = vpack.c.bf16 %v2026, %v2024
      %v2065 = vpack.c.bf16 %v2027, %v2025
      %v2066 = vpack.c.bf16 %v2030, %v2028
      %v2067 = vpack.c.bf16 %v2031, %v2029
      %v2068 = vpack.c.bf16 %v2034, %v2032
      %v2069 = vpack.c.bf16 %v2035, %v2033
      %v2070 = vpack.c.bf16 %v2038, %v2036
      %v2071 = vpack.c.bf16 %v2039, %v2037
      %v2072 = vpack.c.bf16 %v2042, %v2040
      %v2073 = vpack.c.bf16 %v2043, %v2041
      %v2074 = vpack.c.bf16 %v2046, %v2044
      %v2075 = vpack.c.bf16 %v2047, %v2045
      %v2076 = vpack.c.bf16 %v2050, %v2048
      %v2077 = vpack.c.bf16 %v2051, %v2049
      %v2083 = vunpack.c.l.b16 %v1995
      %v2084 = vunpack.c.h.b16 %v1995
      %v2085 = vunpack.c.l.b16 %v1996
      %v2086 = vunpack.c.h.b16 %v1996
      %v2087 = vunpack.c.l.b16 %v1997
      %v2088 = vunpack.c.h.b16 %v1997
      %v2089 = vunpack.c.l.b16 %v1998
      %v2090 = vunpack.c.h.b16 %v1998
      %v2091 = vunpack.c.l.b16 %v1999
      %v2092 = vunpack.c.h.b16 %v1999
      %v2093 = vpack.c.b16 %v2085, %v2083
      %v2094 = vpack.c.b16 %v2086, %v2084
      %v2095 = vpack.c.b16 %v2089, %v2087
      %v2096 = vpack.c.b16 %v2090, %v2088
      %v2097 = vpack.c.b16 %v2091, %v2091
      %v2098 = vpack.c.b16 %v2092, %v2092
      %vm2102 = vcmask 654336
      %v2104 = vsel %vm2102, %v2094, 0
      %v2107 = vsel %vm2102, %v2096, 0
      %v2110 = vsel %vm2102, %v2098, 0
      %2112 = vmatprep.subr.bf16.mxu0 %v2067
      %2113 = vmatpush1.bf16.msra.mxu0 %v2066
      %2114 = vmatprep.subr.bf16.mxu0 %v2065
      %2115 = vmatpush1.bf16.msra.mxu0 %v2064
      %2116 = vmatprep.subr.bf16.mxu0 %v2063
      %2117 = vmatpush1.bf16.msra.mxu0 %v2062
      %2118 = vmatprep.subr.bf16.mxu0 %v2061
      %2119 = vmatpush1.bf16.msra.mxu0 %v2060
      %2120 = vmatprep.subr.bf16.mxu0 %v2059
      %2121 = vmatpush1.bf16.msra.mxu0 %v2058
      %2122 = vmatprep.subr.bf16.mxu0 %v2057
      %2123 = vmatpush1.bf16.msra.mxu0 %v2056
      %2124 = vmatprep.subr.bf16.mxu0 %v2055
      %2125 = vmatpush1.bf16.msra.mxu0 %v2054
      %2126 = vmatprep.subr.bf16.mxu0 %v2053
      %2127 = vmatpush1.bf16.msra.mxu0 %v2052
      %2128 = vmatprep.subr.bf16.mxu0 0
      %2129 = vmatpush2.bf16.msra.mxu0 0
      %2130 = vmatprep.subr.bf16.mxu0 0
      %2131 = vmatpush2.bf16.msra.mxu0 0
      %2132 = vmatprep.subr.bf16.mxu0 0
      %2133 = vmatpush2.bf16.msra.mxu0 0
      %2134 = vmatprep.subr.bf16.mxu0 %v2077
      %2135 = vmatpush2.bf16.msra.mxu0 %v2076
      %2136 = vmatprep.subr.bf16.mxu0 %v2075
      %2137 = vmatpush2.bf16.msra.mxu0 %v2074
      %2138 = vmatprep.subr.bf16.mxu0 %v2073
      %2139 = vmatpush2.bf16.msra.mxu0 %v2072
      %2140 = vmatprep.subr.bf16.mxu0 %v2071
      %2141 = vmatpush2.bf16.msra.mxu0 %v2070
      %2142 = vmatprep.subr.bf16.mxu0 %v2069
      %2143 = vmatpush2.bf16.msra.mxu0 %v2068
      %2144 = vmatprep.mubr.bf16.mxu0 %v2104
      %2145 = vmatmul.mubr.bf16.gmra.mxu0 %v2093
      %v2146 = vpop.f32.mrf.mxu0
      %v2147 = vadd.f32 0.0, %v2146
      %v2148 = vpop.f32.mrf.mxu0
      %v2149 = vadd.f32 0.0, %v2148
      %v2150 = vpop.f32.mrf.mxu0
      %v2151 = vadd.f32 0.0, %v2150
      %v2152 = vpop.f32.mrf.mxu0
      %v2153 = vadd.f32 0.0, %v2152
      %2154 = vmatprep.mubr.bf16.mxu0 %v2107
      %2155 = vmatmul.mubr.bf16.gmra.mxu0 %v2095
      %v2156 = vpop.f32.mrf.mxu0
      %v2157 = vadd.f32 0.0, %v2156
      %v2158 = vpop.f32.mrf.mxu0
      %v2159 = vadd.f32 0.0, %v2158
      %v2160 = vpop.f32.mrf.mxu0
      %v2161 = vadd.f32 0.0, %v2160
      %v2162 = vpop.f32.mrf.mxu0
      %v2163 = vadd.f32 0.0, %v2162
      %2164 = vmatprep.mubr.bf16.mxu0 %v2110
      %2165 = vmatmul.mubr.bf16.gmra.mxu0 %v2097
      %v2166 = vpop.f32.mrf.mxu0
      %v2167 = vadd.f32 0.0, %v2166
      %v2168 = vpop.f32.mrf.mxu0
      %v2169 = vadd.f32 0.0, %v2168
      %v2170 = vpop.f32.mrf.mxu0
      %v2171 = vpop.f32.mrf.mxu0
      %2172 = vdwg.mxu0
      %v2173 = vld [vmem:[%s6] sm:$0xff]
      %v2174 = vld [vmem:[%s6 + $0x8] sm:$0xff]
      %v2175 = vld [vmem:[%s6 + $0x10] sm:$0xff]
      %v2176 = vld [vmem:[%s6 + $0x18] sm:$0xff]
      %v2177 = vld [vmem:[%s6 + $0x20] sm:$0xff]
      %2179 = vset.pattern.permute.xlu0 0
      %2180 = vperm.xlu0 %2179, %v2173
      %v2181 = vpop.permute.xlu0 %2180
      %2184 = vset.pattern.permute.xlu0 0
      %2185 = vperm.xlu0 %2184, %v2174
      %v2186 = vpop.permute.xlu0 %2185
      %2189 = vset.pattern.permute.xlu0 0
      %2190 = vperm.xlu0 %2189, %v2175
      %v2191 = vpop.permute.xlu0 %2190
      %2194 = vset.pattern.permute.xlu0 0
      %2195 = vperm.xlu0 %2194, %v2176
      %v2196 = vpop.permute.xlu0 %2195
      %2199 = vset.pattern.permute.xlu0 0
      %2200 = vperm.xlu0 %2199, %v2177
      %v2201 = vpop.permute.xlu0 %2200
      %v2203 = vmul.f32 %v2147, %v2181
      %v2204 = vmul.f32 %v2149, %v2181
      %v2205 = vmul.f32 %v2151, %v2186
      %v2206 = vmul.f32 %v2153, %v2186
      %v2207 = vmul.f32 %v2157, %v2191
      %v2208 = vmul.f32 %v2159, %v2191
      %v2209 = vmul.f32 %v2161, %v2196
      %v2210 = vmul.f32 %v2163, %v2196
      %v2211 = vmul.f32 %v2167, %v2201
      %v2212 = vmul.f32 %v2169, %v2201
      %v2213 = vld [vmem:[%s7] sm:$0xff]
      %v2214 = vld [vmem:[%s7 + $0x8] sm:$0xff]
      %v2215 = vld [vmem:[%s7 + $0x10] sm:$0xff]
      %v2216 = vld [vmem:[%s7 + $0x18] sm:$0xff]
      %v2217 = vld [vmem:[%s7 + $0x20] sm:$0xff]
      %2219 = vset.pattern.permute.xlu0 0
      %2220 = vperm.xlu0 %2219, %v2213
      %v2221 = vpop.permute.xlu0 %2220
      %2224 = vset.pattern.permute.xlu0 0
      %2225 = vperm.xlu0 %2224, %v2214
      %v2226 = vpop.permute.xlu0 %2225
      %2229 = vset.pattern.permute.xlu0 0
      %2230 = vperm.xlu0 %2229, %v2215
      %v2231 = vpop.permute.xlu0 %2230
      %2234 = vset.pattern.permute.xlu0 0
      %2235 = vperm.xlu0 %2234, %v2216
      %v2236 = vpop.permute.xlu0 %2235
      %2239 = vset.pattern.permute.xlu0 0
      %2240 = vperm.xlu0 %2239, %v2217
      %v2241 = vpop.permute.xlu0 %2240
      %v2243 = vadd.f32 %v2203, %v2221
      %v2244 = vadd.f32 %v2204, %v2221
      %v2245 = vadd.f32 %v2205, %v2226
      %v2246 = vadd.f32 %v2206, %v2226
      %v2247 = vadd.f32 %v2207, %v2231
      %v2248 = vadd.f32 %v2208, %v2231
      %v2249 = vadd.f32 %v2209, %v2236
      %v2250 = vadd.f32 %v2210, %v2236
      %v2251 = vadd.f32 %v2211, %v2241
      %v2252 = vadd.f32 %v2212, %v2241
      %v2253 = vmax.f32 %v2243, 0.0
      %v2254 = vmax.f32 %v2244, 0.0
      %v2255 = vmax.f32 %v2245, 0.0
      %v2256 = vmax.f32 %v2246, 0.0
      %v2257 = vmax.f32 %v2247, 0.0
      %v2258 = vmax.f32 %v2248, 0.0
      %v2259 = vmax.f32 %v2249, 0.0
      %v2260 = vmax.f32 %v2250, 0.0
      %v2261 = vmax.f32 %v2251, 0.0
      %v2262 = vmax.f32 %v2252, 0.0
      %v2263 = vld [vmem:[%s8] sm:$0xf]
      %v2264 = vpack.c.bf16 %v2255, %v2253
      %v2265 = vpack.c.bf16 %v2256, %v2254
      %v2266 = vpack.c.bf16 %v2259, %v2257
      %v2267 = vpack.c.bf16 %v2260, %v2258
      %v2268 = vpack.c.bf16 %v2261, %v2261
      %v2269 = vpack.c.bf16 %v2262, %v2262
      %vm2270 = vcmask 326656
      %v2272 = vsel %vm2270, %v2263, 0
      %vm2274 = vcmask 1043456
      %v2276 = vsel %vm2274, %v2268, 0
      %v2279 = vsel %vm2274, %v2269, 0
      %2281 = vmatprep.subr.bf16.mxu0 0
      %2282 = vmatpush1.bf16.msra.mxu0 0
      %2283 = vmatprep.subr.bf16.mxu0 0
      %2284 = vmatpush1.bf16.msra.mxu0 0
      %2285 = vmatprep.subr.bf16.mxu0 0
      %2286 = vmatpush1.bf16.msra.mxu0 0
      %2287 = vmatprep.subr.bf16.mxu0 0
      %2288 = vmatpush1.bf16.msra.mxu0 0
      %2289 = vmatprep.subr.bf16.mxu0 0
      %2290 = vmatpush1.bf16.msra.mxu0 0
      %2291 = vmatprep.subr.bf16.mxu0 %v2279
      %2292 = vmatpush1.bf16.msra.mxu0 %v2276
      %2293 = vmatprep.subr.bf16.mxu0 %v2267
      %2294 = vmatpush1.bf16.msra.mxu0 %v2266
      %2295 = vmatprep.subr.bf16.mxu0 %v2265
      %2296 = vmatpush1.bf16.msra.mxu0 %v2264
      %2297 = vmatprep.subr.bf16.mxu0 0
      %2298 = vmatpush2.bf16.msra.mxu0 0
      %2299 = vmatprep.subr.bf16.mxu0 0
      %2300 = vmatpush2.bf16.msra.mxu0 0
      %2301 = vmatprep.subr.bf16.mxu0 0
      %2302 = vmatpush2.bf16.msra.mxu0 0
      %2303 = vmatprep.subr.bf16.mxu0 0
      %2304 = vmatpush2.bf16.msra.mxu0 0
      %2305 = vmatprep.subr.bf16.mxu0 0
      %2306 = vmatpush2.bf16.msra.mxu0 0
      %2307 = vmatprep.subr.bf16.mxu0 0
      %2308 = vmatpush2.bf16.msra.mxu0 0
      %2309 = vmatprep.subr.bf16.mxu0 0
      %2310 = vmatpush2.bf16.msra.mxu0 0
      %2311 = vmatprep.subr.bf16.mxu0 0
      %2312 = vmatpush2.bf16.msra.mxu0 0
      %2313 = vmatprep.mubr.bf16.mxu0 0
      %2314 = vmatmul.mubr.bf16.gmra.mxu0 %v2272
      %v2315 = vpop.f32.mrf.mxu0
      %v2316 = vadd.f32 0.0, %v2315
      %v2317 = vpop.f32.mrf.mxu0
      %v2318 = vadd.f32 0.0, %v2317
      %v2319 = vpop.f32.mrf.mxu0
      %v2320 = vpop.f32.mrf.mxu0
      %2321 = vdwg.mxu0
      %v2322 = vld [vmem:[%s9] sm:$0xff]
      %2324 = vset.pattern.permute.xlu0 0
      %2325 = vperm.xlu0 %2324, %v2322
      %v2326 = vpop.permute.xlu0 %2325
      %v2328 = vmul.f32 %v2316, %v2326
      %v2329 = vmul.f32 %v2318, %v2326
      %v2330 = vld [vmem:[%s10] sm:$0xff]
      %2332 = vset.pattern.permute.xlu0 0
      %2333 = vperm.xlu0 %2332, %v2330
      %v2334 = vpop.permute.xlu0 %2333
      %v2336 = vadd.f32 %v2328, %v2334
      %v2337 = vadd.f32 %v2329, %v2334
      %v2338 = vmax.f32 %v2336, 0.0
      %v2339 = vmax.f32 %v2337, 0.0
      %2340 = vst [vmem:[%s386] sm:$0xff] %v2338
      %2341 = vst [vmem:[%s386 + $0x8] sm:$0xff] %v2339
      %p2342 = scmp.lt.s32.totalorder %s22, 1
      %s2343 = scalar_select %p2342, %s22, 1
      %s2344 = smul.addr %s2343, 2
      %s2345 = smul.addr %s2344, 8
      %s2346 = scalar_lea.vmem %s11, %s2345
      // Predicated region
      $region65: #{bottleneck_forward.1} parent=63 // pred_check
        %p2347 = pneg %p276
      $region66: #{bottleneck_forward.1} parent=63 // pred_check_branch
        %2349 = sbr.rel (%p2347) target = $region68
      $region67: #{bottleneck_forward.1} parent=63 // pred_region
        _
      $region68: #{bottleneck_forward.1} parent=63 // pred_fallthru
        _
    $region64: #{bottleneck_forward.1} parent=5 // pred_fallthru
      _
    %p2350 = scmp.le.s32.totalorder 2, %s17
    // Predicated region
    $region69: #{bottleneck_forward.1} parent=5 // pred_check
      %p2351 = pneg %p2350
    $region70: #{bottleneck_forward.1} parent=5 // pred_check_branch
      %2353 = sbr.rel (%p2351) target = $region72
    $region71: #{bottleneck_forward.1} parent=5 // pred_region
      %s2354 = ssub.s32 %s17, 2
      // Predicated region
      $region73: #{bottleneck_forward.1} parent=71 // pred_check
        %p2355 = pneg %p282
      $region74: #{bottleneck_forward.1} parent=71 // pred_check_branch
        %2357 = sbr.rel (%p2355) target = $region76
      $region75: #{bottleneck_forward.1} parent=71 // pred_region
        %p2358 = scmp.lt.s32.totalorder %s23, 1
        %s2359 = scalar_select %p2358, %s23, 1
        %s2360 = smul.addr %s2359, 2
        %s2361 = smul.addr %s2360, 8
        %s2362 = scalar_lea.vmem %s11, %s2361
      $region76: #{bottleneck_forward.1} parent=71 // pred_fallthru
        _
    $region72: #{bottleneck_forward.1} parent=5 // pred_fallthru
      _
  $region6: #{bottleneck_forward.1} parent=0 // loop_footer
    %s21 = sadd.s32 1, %s17
  $region7: #{bottleneck_forward.1} parent=0 // loop_footer_branch
    %16 = sbr.rel target = $region3
  $region8: #{bottleneck_forward.1} parent=0 // loop_exit
    _

</llo_original>
